<compile_context>
chip_gen: v5e
topology: v5e:2x2
jax: 0.10.0
libtpu: 0.0.40
codegen_flags: <defaults>
</compile_context>

<pallas_src>
import numpy as np
import jax
import jax.numpy as jnp
from jax.experimental import pallas as pl
from jax.experimental.pallas import tpu as pltpu


# -----------------------------------------------------------------------------
# Fused LSTM-cell kernel: one gates GEMM + nonlinearities + state update
# -----------------------------------------------------------------------------
def _lstm_cell_kernel(x_ref, h_ref, c_ref, w_ref, b_ref, h_out_ref, c_out_ref):
    # x:   (TB, IN) f32      h, c: (TB, H) f32
    # w:   (IN+H, 4H) bf16   (pre-transposed, pre-concatenated, pre-cast)
    # b:   (1, 4H) f32       (b_ih + b_hh folded host-side)
    H = c_ref.shape[-1]

    # Single K=(IN+H) MXU GEMM on the fused [x | h] activations.
    xh = jnp.concatenate(
        [x_ref[...].astype(jnp.bfloat16), h_ref[...].astype(jnp.bfloat16)],
        axis=-1)
    gates = jnp.dot(xh, w_ref[...], preferred_element_type=jnp.float32)
    gates = gates + b_ref[...]                       # (1, 4H) broadcast, f32

    # PyTorch gate order: i, f, g, o — lane slices at multiples of 128.
    i_g = jax.nn.sigmoid(gates[:, 0 * H:1 * H])
    f_g = jax.nn.sigmoid(gates[:, 1 * H:2 * H])
    g_g = jnp.tanh(gates[:, 2 * H:3 * H])
    o_g = jax.nn.sigmoid(gates[:, 3 * H:4 * H])

    c_new = f_g * c_ref[...] + i_g * g_g
    h_new = o_g * jnp.tanh(c_new)

    c_out_ref[...] = c_new.astype(c_out_ref.dtype)
    h_out_ref[...] = h_new.astype(h_out_ref.dtype)


# -----------------------------------------------------------------------------
# One-time parameter preparation (host-side, outside the jitted forward)
# -----------------------------------------------------------------------------
def prepare_params(params):
    """(w_ih, w_hh, b_ih, b_hh) -> (W_cat[IN+H,4H] bf16, bias[1,4H] f32)."""
    w_ih, w_hh, b_ih, b_hh = params
    w_cat = jnp.concatenate([jnp.transpose(w_ih), jnp.transpose(w_hh)], axis=0)
    w_cat = w_cat.astype(jnp.bfloat16)
    bias = (b_ih + b_hh).reshape(1, -1).astype(jnp.float32)
    return w_cat, bias


def lstm_cell_forward(prep, xt, h, c):
    """xt: (B, IN), h/c: (B, H) float32.  Returns (h', c')."""
    w_cat, bias = prep
    B, IN = xt.shape
    H = h.shape[-1]

    # Batch tile: one block for B <= 256 (no padding, fills the 256-wide MXU
    # on v6e/v7x); 256-row "parallel" tiles for larger batches.
    if B <= 256:
        tb, pad = B, 0
    else:
        tb = 256
        pad = (-B) % tb
        if pad:  # only pad in the large, non-aligned case
            xt = jnp.pad(xt, ((0, pad), (0, 0)))
            h = jnp.pad(h, ((0, pad), (0, 0)))
            c = jnp.pad(c, ((0, pad), (0, 0)))
    Bp = B + pad
    grid = (Bp // tb,)

    def row_spec(cols):
        return pl.BlockSpec((tb, cols), lambda i: (i, 0))

    def const_spec(shape):
        # Constant index_map: weights / bias stay VMEM-resident across tiles.
        return pl.BlockSpec(shape, lambda i: (0, 0))

    h_new, c_new = pl.pallas_call(
        _lstm_cell_kernel,
        out_shape=(jax.ShapeDtypeStruct((Bp, H), xt.dtype),
                   jax.ShapeDtypeStruct((Bp, H), xt.dtype)),
        grid_spec=pltpu.PrefetchScalarGridSpec(
            num_scalar_prefetch=0,
            grid=grid,
            in_specs=[row_spec(IN),                   # xt
                      row_spec(H),                    # h
                      row_spec(H),                    # c
                      const_spec((IN + H, 4 * H)),    # fused W^T (bf16)
                      const_spec((1, 4 * H))],        # folded bias (f32)
            out_specs=(row_spec(H), row_spec(H)),
        ),
        compiler_params=pltpu.CompilerParams(
            dimension_semantics=("parallel",)),
    )(xt, h, c, w_cat, bias)

    if pad:
        h_new = h_new[:B]
        c_new = c_new[:B]
    return h_new, c_new


# -----------------------------------------------------------------------------
# Parameter construction (PyTorch nn.LSTMCell default init) + pure-JAX reference
# -----------------------------------------------------------------------------
def init_params(key, input_size=256, hidden_size=256):
    bound = 1.0 / np.sqrt(hidden_size)
    k1, k2, k3, k4 = jax.random.split(key, 4)
    w_ih = jax.random.uniform(k1, (4 * hidden_size, input_size), jnp.float32,
                              minval=-bound, maxval=bound)
    w_hh = jax.random.uniform(k2, (4 * hidden_size, hidden_size), jnp.float32,
                              minval=-bound, maxval=bound)
    b_ih = jax.random.uniform(k3, (4 * hidden_size,), jnp.float32,
                              minval=-bound, maxval=bound)
    b_hh = jax.random.uniform(k4, (4 * hidden_size,), jnp.float32,
                              minval=-bound, maxval=bound)
    return w_ih, w_hh, b_ih, b_hh


def lstm_cell_reference(params, xt, h, c):
    w_ih, w_hh, b_ih, b_hh = params
    gates = xt @ w_ih.T + b_ih + h @ w_hh.T + b_hh
    i_g, f_g, g_g, o_g = jnp.split(gates, 4, axis=-1)
    c_new = jax.nn.sigmoid(f_g) * c + jax.nn.sigmoid(i_g) * jnp.tanh(g_g)
    h_new = jax.nn.sigmoid(o_g) * jnp.tanh(c_new)
    return h_new, c_new


# -----------------------------------------------------------------------------
# Demo / self-check
# -----------------------------------------------------------------------------
if __name__ == "__main__":
    INPUT_SIZE = 256      # fixed by the module
    HIDDEN_SIZE = 256     # fixed by the module
    BATCH = 8

    key = jax.random.PRNGKey(0)
    kx, kh, kc, kp = jax.random.split(key, 4)
    xt = jax.random.normal(kx, (BATCH, INPUT_SIZE), jnp.float32)
    h0 = jax.random.normal(kh, (BATCH, HIDDEN_SIZE), jnp.float32)
    c0 = jax.random.normal(kc, (BATCH, HIDDEN_SIZE), jnp.float32)
    params = init_params(kp, INPUT_SIZE, HIDDEN_SIZE)

    # One-time layout/dtype prep (transposes, concat, bias fold, bf16 cast)
    # happens here, NOT inside the jitted per-step forward.
    prep = jax.block_until_ready(prepare_params(params))

    fwd = jax.jit(lstm_cell_forward)
    h1, c1 = fwd(prep, xt, h0, c0)
    (h1, c1) = jax.block_until_ready((h1, c1))

    assert h1.shape == (BATCH, HIDDEN_SIZE), h1.shape
    assert c1.shape == (BATCH, HIDDEN_SIZE), c1.shape
    assert bool(jnp.all(jnp.isfinite(h1))) and bool(jnp.all(jnp.isfinite(c1)))

    # bf16 weights/activations in the GEMM -> relaxed tolerance vs f32 reference.
    h_ref, c_ref = lstm_cell_reference(params, xt, h0, c0)
    assert bool(jnp.allclose(h1, h_ref, atol=2e-2, rtol=2e-2)), \
        float(jnp.max(jnp.abs(h1 - h_ref)))
    assert bool(jnp.allclose(c1, c_ref, atol=2e-2, rtol=2e-2)), \
        float(jnp.max(jnp.abs(c1 - c_ref)))

    print("KERNEL_OK")
</pallas_src>

<mosaic_0001>
module attributes {stable_mosaic.version = 11 : i64} {
  func.func @_lstm_cell_kernel(%arg0: i32, %arg1: memref<8x256xf32, #tpu.memory_space<vmem>>, %arg2: memref<8x256xf32, #tpu.memory_space<vmem>>, %arg3: memref<8x256xf32, #tpu.memory_space<vmem>>, %arg4: memref<512x1024xbf16, #tpu.memory_space<vmem>>, %arg5: memref<1x1024xf32, #tpu.memory_space<vmem>>, %arg6: memref<8x256xf32, #tpu.memory_space<vmem>>, %arg7: memref<8x256xf32, #tpu.memory_space<vmem>>) attributes {dimension_semantics = [#tpu.dimension_semantics<parallel>], iteration_bounds = array<i64: 1>, scalar_prefetch = 0 : i64, scratch_operands = 0 : i64, tpu.core_type = #tpu.core_type<tc>, window_params = [{transform_indices = @transform_0, window_bounds = array<i64: 8, 256>}, {transform_indices = @transform_1, window_bounds = array<i64: 8, 256>}, {transform_indices = @transform_2, window_bounds = array<i64: 8, 256>}, {pipeline_mode = #tpu.pipeline_mode<synchronous>, transform_indices = @transform_3, window_bounds = array<i64: 512, 1024>}, {pipeline_mode = #tpu.pipeline_mode<synchronous>, transform_indices = @transform_4, window_bounds = array<i64: 1, 1024>}, {transform_indices = @transform_5, window_bounds = array<i64: 8, 256>}, {transform_indices = @transform_6, window_bounds = array<i64: 8, 256>}]} {
    %c0 = arith.constant 0 : index
    %c0_0 = arith.constant 0 : index
    %0 = vector.load %arg1[%c0, %c0_0] : memref<8x256xf32, #tpu.memory_space<vmem>>, vector<8x256xf32>
    %1 = arith.truncf %0 : vector<8x256xf32> to vector<8x256xbf16>
    %c0_1 = arith.constant 0 : index
    %c0_2 = arith.constant 0 : index
    %2 = vector.load %arg2[%c0_1, %c0_2] : memref<8x256xf32, #tpu.memory_space<vmem>>, vector<8x256xf32>
    %3 = arith.truncf %2 : vector<8x256xf32> to vector<8x256xbf16>
    %4 = tpu.concatenate %1, %3 in 1 : vector<8x256xbf16>, vector<8x256xbf16> -> vector<8x512xbf16>
    %c0_3 = arith.constant 0 : index
    %c0_4 = arith.constant 0 : index
    %5 = vector.load %arg4[%c0_3, %c0_4] : memref<512x1024xbf16, #tpu.memory_space<vmem>>, vector<512x1024xbf16>
    %cst = arith.constant dense<0.000000e+00> : vector<8x1024xf32>
    %6 = tpu.matmul %4, %5, %cst {dimension_numbers = #tpu.dot_dimension_numbers<[1], [0], [0], [1], [0, 0, 1, 1], [], []>} : vector<8x512xbf16>, vector<512x1024xbf16>, vector<8x1024xf32> -> vector<8x1024xf32>
    %c0_5 = arith.constant 0 : index
    %c0_6 = arith.constant 0 : index
    %7 = vector.load %arg5[%c0_5, %c0_6] : memref<1x1024xf32, #tpu.memory_space<vmem>>, vector<1x1024xf32>
    %8 = vector.broadcast %7 : vector<1x1024xf32> to vector<8x1024xf32>
    %9 = arith.addf %6, %8 : vector<8x1024xf32>
    %10 = vector.extract_strided_slice %9 {offsets = [0, 0], sizes = [8, 256], strides = [1, 1]} : vector<8x1024xf32> to vector<8x256xf32>
    %11 = arith.negf %10 : vector<8x256xf32>
    %12 = math.exp %11 : vector<8x256xf32>
    %cst_7 = arith.constant 1.000000e+00 : f32
    %13 = vector.broadcast %cst_7 : f32 to vector<8x256xf32>
    %14 = arith.addf %13, %12 : vector<8x256xf32>
    %15 = arith.divf %13, %14 : vector<8x256xf32>
    %16 = vector.extract_strided_slice %9 {offsets = [0, 256], sizes = [8, 256], strides = [1, 1]} : vector<8x1024xf32> to vector<8x256xf32>
    %17 = arith.negf %16 : vector<8x256xf32>
    %18 = math.exp %17 : vector<8x256xf32>
    %cst_8 = arith.constant 1.000000e+00 : f32
    %19 = vector.broadcast %cst_8 : f32 to vector<8x256xf32>
    %20 = arith.addf %19, %18 : vector<8x256xf32>
    %21 = arith.divf %19, %20 : vector<8x256xf32>
    %22 = vector.extract_strided_slice %9 {offsets = [0, 512], sizes = [8, 256], strides = [1, 1]} : vector<8x1024xf32> to vector<8x256xf32>
    %23 = math.tanh %22 : vector<8x256xf32>
    %24 = vector.extract_strided_slice %9 {offsets = [0, 768], sizes = [8, 256], strides = [1, 1]} : vector<8x1024xf32> to vector<8x256xf32>
    %25 = arith.negf %24 : vector<8x256xf32>
    %26 = math.exp %25 : vector<8x256xf32>
    %cst_9 = arith.constant 1.000000e+00 : f32
    %27 = vector.broadcast %cst_9 : f32 to vector<8x256xf32>
    %28 = arith.addf %27, %26 : vector<8x256xf32>
    %29 = arith.divf %27, %28 : vector<8x256xf32>
    %c0_10 = arith.constant 0 : index
    %c0_11 = arith.constant 0 : index
    %30 = vector.load %arg3[%c0_10, %c0_11] : memref<8x256xf32, #tpu.memory_space<vmem>>, vector<8x256xf32>
    %31 = arith.mulf %21, %30 : vector<8x256xf32>
    %32 = arith.mulf %15, %23 : vector<8x256xf32>
    %33 = arith.addf %31, %32 : vector<8x256xf32>
    %34 = math.tanh %33 : vector<8x256xf32>
    %35 = arith.mulf %29, %34 : vector<8x256xf32>
    %c0_12 = arith.constant 0 : index
    %c0_13 = arith.constant 0 : index
    %36 = vector.load %arg7[%c0_12, %c0_13] : memref<8x256xf32, #tpu.memory_space<vmem>>, vector<8x256xf32>
    tpu.vector_store %arg7[%c0_12, %c0_13], %33 {strides = array<i32>} : memref<8x256xf32, #tpu.memory_space<vmem>>, vector<8x256xf32>,
    %c0_14 = arith.constant 0 : index
    %c0_15 = arith.constant 0 : index
    %37 = vector.load %arg6[%c0_14, %c0_15] : memref<8x256xf32, #tpu.memory_space<vmem>>, vector<8x256xf32>
    tpu.vector_store %arg6[%c0_14, %c0_15], %35 {strides = array<i32>} : memref<8x256xf32, #tpu.memory_space<vmem>>, vector<8x256xf32>,
    return
  }
  func.func @transform_0(%arg0: i32) -> (i32, i32) {
    %c0_i32 = arith.constant 0 : i32
    %c0_i32_0 = arith.constant 0 : i32
    return %arg0, %c0_i32 : i32, i32
  }
  func.func @transform_1(%arg0: i32) -> (i32, i32) {
    %c0_i32 = arith.constant 0 : i32
    %c0_i32_0 = arith.constant 0 : i32
    return %arg0, %c0_i32 : i32, i32
  }
  func.func @transform_2(%arg0: i32) -> (i32, i32) {
    %c0_i32 = arith.constant 0 : i32
    %c0_i32_0 = arith.constant 0 : i32
    return %arg0, %c0_i32 : i32, i32
  }
  func.func @transform_3(%arg0: i32) -> (i32, i32) {
    %c0_i32 = arith.constant 0 : i32
    %c0_i32_0 = arith.constant 0 : i32
    %c0_i32_1 = arith.constant 0 : i32
    return %c0_i32, %c0_i32_0 : i32, i32
  }
  func.func @transform_4(%arg0: i32) -> (i32, i32) {
    %c0_i32 = arith.constant 0 : i32
    %c0_i32_0 = arith.constant 0 : i32
    %c0_i32_1 = arith.constant 0 : i32
    return %c0_i32, %c0_i32_0 : i32, i32
  }
  func.func @transform_5(%arg0: i32) -> (i32, i32) {
    %c0_i32 = arith.constant 0 : i32
    %c0_i32_0 = arith.constant 0 : i32
    return %arg0, %c0_i32 : i32, i32
  }
  func.func @transform_6(%arg0: i32) -> (i32, i32) {
    %c0_i32 = arith.constant 0 : i32
    %c0_i32_0 = arith.constant 0 : i32
    return %arg0, %c0_i32 : i32, i32
  }
}

</mosaic_0001>

<llo_original>
// kernel: lstm_cell_forward.1
$region0: #{lstm_cell_forward.1}
  #allocation0 [shape = 'u32[]', space=smem, size = 0x4, offset = 0x4, fixed_abs, tag = 'smem constant byte address 0x4 - core index']
  #allocation1 [shape = 'u32[72,128]{1,0:T(1,128)}', space=vmem, size = 0x9000, scoped, tag = 'internal scratch']
  %s0 = inlined_call_operand.hbm [shape: f32[8,256], index: 0, kind: input, shape index: {}]
  %s1 = inlined_call_operand.hbm [shape: f32[8,256], index: 1, kind: input, shape index: {}]
  %s2 = inlined_call_operand.hbm [shape: f32[8,256], index: 2, kind: input, shape index: {}]
  %s3 = inlined_call_operand.hbm [shape: bf16[512,1024], index: 3, kind: input, shape index: {}]
  %s4 = inlined_call_operand.hbm [shape: f32[1,1024], index: 4, kind: input, shape index: {}]
  %s5 = inlined_call_operand.hbm [shape: f32[8,256], index: 5, kind: output, shape index: {0}]
  %s6 = inlined_call_operand.hbm [shape: f32[8,256], index: 6, kind: output, shape index: {1}]
  %7 = xla_tuple %s5, %s6
  %s8 = sld [smem:[#allocation0]]
  $region58: #{lstm_cell_forward.1} parent=0
    _
  %s10 = ssub.s32 1, %s8
  %s11 = scalar_select 0, %s10, %s8
  $region1: #{lstm_cell_forward.1} parent=0
    #allocation2 [shape = 'u8[8192]{0}', space=vmem, size = 0x2000, scoped, tag = 'input window, operand 0, single buffered']
    #allocation3 [shape = 's32[1]{0}', space=sflag, size = 0x4, scoped, tag = 'scoped memory for lstm_cell_forward.1']
    #allocation4 [shape = 's32[1]{0}', space=sflag, size = 0x4, scoped, tag = 'scoped memory for lstm_cell_forward.1']
    #allocation5 [shape = 'u8[8192]{0}', space=vmem, size = 0x2000, scoped, tag = 'input window, operand 1, single buffered']
    #allocation6 [shape = 's32[1]{0}', space=sflag, size = 0x4, scoped, tag = 'scoped memory for lstm_cell_forward.1']
    #allocation7 [shape = 'u8[8192]{0}', space=vmem, size = 0x2000, scoped, tag = 'input window, operand 2, single buffered']
    #allocation8 [shape = 'u8[1048576]{0}', space=vmem, size = 0x100000, scoped, tag = 'input window, operand 3, single buffered']
    #allocation9 [shape = 's32[1]{0}', space=sflag, size = 0x4, scoped, tag = 'scoped memory for lstm_cell_forward.1']
    #allocation10 [shape = 'u8[4096]{0}', space=vmem, size = 0x1000, scoped, tag = 'input window, operand 4, single buffered']
    #allocation11 [shape = 'u8[8192]{0}', space=vmem, size = 0x2000, scoped, tag = 'output window, operand 0, single buffered']
    #allocation12 [shape = 'u8[8192]{0}', space=vmem, size = 0x2000, scoped, tag = 'output window, operand 1, single buffered']
    #allocation13 [shape = 's32[1]{0}', space=sflag, size = 0x4, scoped, tag = 'scoped memory for lstm_cell_forward.1']
    %12 = vsyncpa [#allocation3], 0
    %13 = vsyncpa [#allocation6], 0
    %14 = vsyncpa [#allocation9], 0
    %15 = vsyncpa [#allocation4], 0
    %16 = vsyncpa [#allocation13], 0
    // Predicated region
    $region2: #{lstm_cell_forward.1} parent=1 // pred_check
      _
    $region3: #{lstm_cell_forward.1} parent=1 // pred_check_branch
      %18 = sbr.rel (0) target = $region5
    $region4: #{lstm_cell_forward.1} parent=1 // pred_region
      %20 = vsyncadd [#allocation3], 0
      %s22 = sshll.u32 %s0, 4
      %s23 = int_to_ptr.hbm [resolvable:$true] %s22
      %s24 = sshll.u32 [#allocation2], 4
      %s25 = int_to_ptr.vmem [resolvable:$true] %s24
      %27 = dma.hbm_to_vmem [thread:$0]  %s23, 256, %s25, [#allocation3]
    $region5: #{lstm_cell_forward.1} parent=1 // pred_fallthru
      _
    // Predicated region
    $region6: #{lstm_cell_forward.1} parent=1 // pred_check
      _
    $region7: #{lstm_cell_forward.1} parent=1 // pred_check_branch
      %29 = sbr.rel (0) target = $region9
    $region8: #{lstm_cell_forward.1} parent=1 // pred_region
      %31 = vsyncadd [#allocation6], 0
      %s33 = sshll.u32 %s1, 4
      %s34 = int_to_ptr.hbm [resolvable:$true] %s33
      %s35 = sshll.u32 [#allocation5], 4
      %s36 = int_to_ptr.vmem [resolvable:$true] %s35
      %38 = dma.hbm_to_vmem [thread:$0]  %s34, 256, %s36, [#allocation6]
    $region9: #{lstm_cell_forward.1} parent=1 // pred_fallthru
      _
    // Predicated region
    $region10: #{lstm_cell_forward.1} parent=1 // pred_check
      _
    $region11: #{lstm_cell_forward.1} parent=1 // pred_check_branch
      %40 = sbr.rel (0) target = $region13
    $region12: #{lstm_cell_forward.1} parent=1 // pred_region
      %42 = vsyncadd [#allocation6], 0
      %s44 = sshll.u32 %s2, 4
      %s45 = int_to_ptr.hbm [resolvable:$true] %s44
      %s46 = sshll.u32 [#allocation7], 4
      %s47 = int_to_ptr.vmem [resolvable:$true] %s46
      %49 = dma.hbm_to_vmem [thread:$0]  %s45, 256, %s47, [#allocation6]
    $region13: #{lstm_cell_forward.1} parent=1 // pred_fallthru
      _
    // Predicated region
    $region14: #{lstm_cell_forward.1} parent=1 // pred_check
      _
    $region15: #{lstm_cell_forward.1} parent=1 // pred_check_branch
      %51 = sbr.rel (0) target = $region17
    $region16: #{lstm_cell_forward.1} parent=1 // pred_region
      %53 = vsyncadd [#allocation9], 0
      %s54 = sshll.u32 %s3, 4
      %s55 = int_to_ptr.hbm [resolvable:$true] %s54
      %s56 = sshll.u32 [#allocation8], 4
      %s57 = int_to_ptr.vmem [resolvable:$true] %s56
      %62 = dma.hbm_to_vmem [thread:$0]  %s55, 32768, %s57, [#allocation9], 512, 512, 32
    $region17: #{lstm_cell_forward.1} parent=1 // pred_fallthru
      _
    // Predicated region
    $region18: #{lstm_cell_forward.1} parent=1 // pred_check
      _
    $region19: #{lstm_cell_forward.1} parent=1 // pred_check_branch
      %64 = sbr.rel (0) target = $region21
    $region20: #{lstm_cell_forward.1} parent=1 // pred_region
      %66 = vsyncadd [#allocation9], 0
      %s68 = sshll.u32 %s4, 4
      %s69 = int_to_ptr.hbm [resolvable:$true] %s68
      %s70 = sshll.u32 [#allocation10], 4
      %s71 = int_to_ptr.vmem [resolvable:$true] %s70
      %73 = dma.hbm_to_vmem [thread:$0]  %s69, 128, %s71, [#allocation9]
    $region21: #{lstm_cell_forward.1} parent=1 // pred_fallthru
      _
    // Predicated region
    $region22: #{lstm_cell_forward.1} parent=1 // pred_check
      _
    $region23: #{lstm_cell_forward.1} parent=1 // pred_check_branch
      %75 = sbr.rel (0) target = $region25
    $region24: #{lstm_cell_forward.1} parent=1 // pred_region
      %77 = dma.done [#allocation3], 256
    $region25: #{lstm_cell_forward.1} parent=1 // pred_fallthru
      _
    // Predicated region
    $region26: #{lstm_cell_forward.1} parent=1 // pred_check
      _
    $region27: #{lstm_cell_forward.1} parent=1 // pred_check_branch
      %79 = sbr.rel (0) target = $region29
    $region28: #{lstm_cell_forward.1} parent=1 // pred_region
      %81 = dma.done [#allocation6], 256
    $region29: #{lstm_cell_forward.1} parent=1 // pred_fallthru
      _
    // Predicated region
    $region30: #{lstm_cell_forward.1} parent=1 // pred_check
      _
    $region31: #{lstm_cell_forward.1} parent=1 // pred_check_branch
      %83 = sbr.rel (0) target = $region33
    $region32: #{lstm_cell_forward.1} parent=1 // pred_region
      %85 = dma.done [#allocation6], 256
    $region33: #{lstm_cell_forward.1} parent=1 // pred_fallthru
      _
    // Predicated region
    $region34: #{lstm_cell_forward.1} parent=1 // pred_check
      _
    $region35: #{lstm_cell_forward.1} parent=1 // pred_check_branch
      %87 = sbr.rel (0) target = $region37
    $region36: #{lstm_cell_forward.1} parent=1 // pred_region
      %89 = dma.done [#allocation9], 32768
    $region37: #{lstm_cell_forward.1} parent=1 // pred_fallthru
      _
    // Predicated region
    $region38: #{lstm_cell_forward.1} parent=1 // pred_check
      _
    $region39: #{lstm_cell_forward.1} parent=1 // pred_check_branch
      %91 = sbr.rel (0) target = $region41
    $region40: #{lstm_cell_forward.1} parent=1 // pred_region
      %93 = dma.done [#allocation9], 128
    $region41: #{lstm_cell_forward.1} parent=1 // pred_fallthru
      _
    %v94 = vld [vmem:[#allocation2] sm:$0xff]
    %v95 = vld [vmem:[#allocation2 + $0x8] sm:$0xff]
    %v96 = vpack.c.bf16 %v95, %v94
    %v97 = vld [vmem:[#allocation5] sm:$0xff]
    %v98 = vld [vmem:[#allocation5 + $0x8] sm:$0xff]
    %v99 = vpack.c.bf16 %v98, %v97
    %v101 = vunpack.c.l.b16 %v96
    %v102 = vunpack.c.h.b16 %v96
    %v103 = vpack.c.b16 %v101, %v101
    %v104 = vpack.c.b16 %v102, %v102
    %v108 = vunpack.c.l.b16 %v99
    %v109 = vunpack.c.h.b16 %v99
    %v110 = vpack.c.b16 %v108, %v108
    %v111 = vpack.c.b16 %v109, %v109
    %v114 = vld [vmem:[#allocation8] sm:$0xff]
    %v115 = vld [vmem:[#allocation8 + $0x8] sm:$0xff]
    %v116 = vld [vmem:[#allocation8 + $0x10] sm:$0xff]
    %v117 = vld [vmem:[#allocation8 + $0x18] sm:$0xff]
    %v118 = vld [vmem:[#allocation8 + $0x20] sm:$0xff]
    %v119 = vld [vmem:[#allocation8 + $0x28] sm:$0xff]
    %v120 = vld [vmem:[#allocation8 + $0x30] sm:$0xff]
    %v121 = vld [vmem:[#allocation8 + $0x38] sm:$0xff]
    %v122 = vld [vmem:[#allocation8 + $0x40] sm:$0xff]
    %v123 = vld [vmem:[#allocation8 + $0x48] sm:$0xff]
    %v124 = vld [vmem:[#allocation8 + $0x50] sm:$0xff]
    %v125 = vld [vmem:[#allocation8 + $0x58] sm:$0xff]
    %v126 = vld [vmem:[#allocation8 + $0x60] sm:$0xff]
    %v127 = vld [vmem:[#allocation8 + $0x68] sm:$0xff]
    %v128 = vld [vmem:[#allocation8 + $0x70] sm:$0xff]
    %v129 = vld [vmem:[#allocation8 + $0x78] sm:$0xff]
    %v130 = vld [vmem:[#allocation8 + $0x80] sm:$0xff]
    %v131 = vld [vmem:[#allocation8 + $0x88] sm:$0xff]
    %v132 = vld [vmem:[#allocation8 + $0x90] sm:$0xff]
    %v133 = vld [vmem:[#allocation8 + $0x98] sm:$0xff]
    %v134 = vld [vmem:[#allocation8 + $0xa0] sm:$0xff]
    %v135 = vld [vmem:[#allocation8 + $0xa8] sm:$0xff]
    %v136 = vld [vmem:[#allocation8 + $0xb0] sm:$0xff]
    %v137 = vld [vmem:[#allocation8 + $0xb8] sm:$0xff]
    %v138 = vld [vmem:[#allocation8 + $0xc0] sm:$0xff]
    %v139 = vld [vmem:[#allocation8 + $0xc8] sm:$0xff]
    %v140 = vld [vmem:[#allocation8 + $0xd0] sm:$0xff]
    %v141 = vld [vmem:[#allocation8 + $0xd8] sm:$0xff]
    %v142 = vld [vmem:[#allocation8 + $0xe0] sm:$0xff]
    %v143 = vld [vmem:[#allocation8 + $0xe8] sm:$0xff]
    %v144 = vld [vmem:[#allocation8 + $0xf0] sm:$0xff]
    %v145 = vld [vmem:[#allocation8 + $0xf8] sm:$0xff]
    %v146 = vld [vmem:[#allocation8 + $0x100] sm:$0xff]
    %v147 = vld [vmem:[#allocation8 + $0x108] sm:$0xff]
    %v148 = vld [vmem:[#allocation8 + $0x110] sm:$0xff]
    %v149 = vld [vmem:[#allocation8 + $0x118] sm:$0xff]
    %v150 = vld [vmem:[#allocation8 + $0x120] sm:$0xff]
    %v151 = vld [vmem:[#allocation8 + $0x128] sm:$0xff]
    %v152 = vld [vmem:[#allocation8 + $0x130] sm:$0xff]
    %v153 = vld [vmem:[#allocation8 + $0x138] sm:$0xff]
    %v154 = vld [vmem:[#allocation8 + $0x140] sm:$0xff]
    %v155 = vld [vmem:[#allocation8 + $0x148] sm:$0xff]
    %v156 = vld [vmem:[#allocation8 + $0x150] sm:$0xff]
    %v157 = vld [vmem:[#allocation8 + $0x158] sm:$0xff]
    %v158 = vld [vmem:[#allocation8 + $0x160] sm:$0xff]
    %v159 = vld [vmem:[#allocation8 + $0x168] sm:$0xff]
    %v160 = vld [vmem:[#allocation8 + $0x170] sm:$0xff]
    %v161 = vld [vmem:[#allocation8 + $0x178] sm:$0xff]
    %v162 = vld [vmem:[#allocation8 + $0x180] sm:$0xff]
    %v163 = vld [vmem:[#allocation8 + $0x188] sm:$0xff]
    %v164 = vld [vmem:[#allocation8 + $0x190] sm:$0xff]
    %v165 = vld [vmem:[#allocation8 + $0x198] sm:$0xff]
    %v166 = vld [vmem:[#allocation8 + $0x1a0] sm:$0xff]
    %v167 = vld [vmem:[#allocation8 + $0x1a8] sm:$0xff]
    %v168 = vld [vmem:[#allocation8 + $0x1b0] sm:$0xff]
    %v169 = vld [vmem:[#allocation8 + $0x1b8] sm:$0xff]
    %v170 = vld [vmem:[#allocation8 + $0x1c0] sm:$0xff]
    %v171 = vld [vmem:[#allocation8 + $0x1c8] sm:$0xff]
    %v172 = vld [vmem:[#allocation8 + $0x1d0] sm:$0xff]
    %v173 = vld [vmem:[#allocation8 + $0x1d8] sm:$0xff]
    %v174 = vld [vmem:[#allocation8 + $0x1e0] sm:$0xff]
    %v175 = vld [vmem:[#allocation8 + $0x1e8] sm:$0xff]
    %v176 = vld [vmem:[#allocation8 + $0x1f0] sm:$0xff]
    %v177 = vld [vmem:[#allocation8 + $0x1f8] sm:$0xff]
    %v178 = vld [vmem:[#allocation8 + $0x200] sm:$0xff]
    %v179 = vld [vmem:[#allocation8 + $0x208] sm:$0xff]
    %v180 = vld [vmem:[#allocation8 + $0x210] sm:$0xff]
    %v181 = vld [vmem:[#allocation8 + $0x218] sm:$0xff]
    %v182 = vld [vmem:[#allocation8 + $0x220] sm:$0xff]
    %v183 = vld [vmem:[#allocation8 + $0x228] sm:$0xff]
    %v184 = vld [vmem:[#allocation8 + $0x230] sm:$0xff]
    %v185 = vld [vmem:[#allocation8 + $0x238] sm:$0xff]
    %v186 = vld [vmem:[#allocation8 + $0x240] sm:$0xff]
    %v187 = vld [vmem:[#allocation8 + $0x248] sm:$0xff]
    %v188 = vld [vmem:[#allocation8 + $0x250] sm:$0xff]
    %v189 = vld [vmem:[#allocation8 + $0x258] sm:$0xff]
    %v190 = vld [vmem:[#allocation8 + $0x260] sm:$0xff]
    %v191 = vld [vmem:[#allocation8 + $0x268] sm:$0xff]
    %v192 = vld [vmem:[#allocation8 + $0x270] sm:$0xff]
    %v193 = vld [vmem:[#allocation8 + $0x278] sm:$0xff]
    %v194 = vld [vmem:[#allocation8 + $0x280] sm:$0xff]
    %v195 = vld [vmem:[#allocation8 + $0x288] sm:$0xff]
    %v196 = vld [vmem:[#allocation8 + $0x290] sm:$0xff]
    %v197 = vld [vmem:[#allocation8 + $0x298] sm:$0xff]
    %v198 = vld [vmem:[#allocation8 + $0x2a0] sm:$0xff]
    %v199 = vld [vmem:[#allocation8 + $0x2a8] sm:$0xff]
    %v200 = vld [vmem:[#allocation8 + $0x2b0] sm:$0xff]
    %v201 = vld [vmem:[#allocation8 + $0x2b8] sm:$0xff]
    %v202 = vld [vmem:[#allocation8 + $0x2c0] sm:$0xff]
    %v203 = vld [vmem:[#allocation8 + $0x2c8] sm:$0xff]
    %v204 = vld [vmem:[#allocation8 + $0x2d0] sm:$0xff]
    %v205 = vld [vmem:[#allocation8 + $0x2d8] sm:$0xff]
    %v206 = vld [vmem:[#allocation8 + $0x2e0] sm:$0xff]
    %v207 = vld [vmem:[#allocation8 + $0x2e8] sm:$0xff]
    %v208 = vld [vmem:[#allocation8 + $0x2f0] sm:$0xff]
    %v209 = vld [vmem:[#allocation8 + $0x2f8] sm:$0xff]
    %v210 = vld [vmem:[#allocation8 + $0x300] sm:$0xff]
    %v211 = vld [vmem:[#allocation8 + $0x308] sm:$0xff]
    %v212 = vld [vmem:[#allocation8 + $0x310] sm:$0xff]
    %v213 = vld [vmem:[#allocation8 + $0x318] sm:$0xff]
    %v214 = vld [vmem:[#allocation8 + $0x320] sm:$0xff]
    %v215 = vld [vmem:[#allocation8 + $0x328] sm:$0xff]
    %v216 = vld [vmem:[#allocation8 + $0x330] sm:$0xff]
    %v217 = vld [vmem:[#allocation8 + $0x338] sm:$0xff]
    %v218 = vld [vmem:[#allocation8 + $0x340] sm:$0xff]
    %v219 = vld [vmem:[#allocation8 + $0x348] sm:$0xff]
    %v220 = vld [vmem:[#allocation8 + $0x350] sm:$0xff]
    %v221 = vld [vmem:[#allocation8 + $0x358] sm:$0xff]
    %v222 = vld [vmem:[#allocation8 + $0x360] sm:$0xff]
    %v223 = vld [vmem:[#allocation8 + $0x368] sm:$0xff]
    %v224 = vld [vmem:[#allocation8 + $0x370] sm:$0xff]
    %v225 = vld [vmem:[#allocation8 + $0x378] sm:$0xff]
    %v226 = vld [vmem:[#allocation8 + $0x380] sm:$0xff]
    %v227 = vld [vmem:[#allocation8 + $0x388] sm:$0xff]
    %v228 = vld [vmem:[#allocation8 + $0x390] sm:$0xff]
    %v229 = vld [vmem:[#allocation8 + $0x398] sm:$0xff]
    %v230 = vld [vmem:[#allocation8 + $0x3a0] sm:$0xff]
    %v231 = vld [vmem:[#allocation8 + $0x3a8] sm:$0xff]
    %v232 = vld [vmem:[#allocation8 + $0x3b0] sm:$0xff]
    %v233 = vld [vmem:[#allocation8 + $0x3b8] sm:$0xff]
    %v234 = vld [vmem:[#allocation8 + $0x3c0] sm:$0xff]
    %v235 = vld [vmem:[#allocation8 + $0x3c8] sm:$0xff]
    %v236 = vld [vmem:[#allocation8 + $0x3d0] sm:$0xff]
    %v237 = vld [vmem:[#allocation8 + $0x3d8] sm:$0xff]
    %v238 = vld [vmem:[#allocation8 + $0x3e0] sm:$0xff]
    %v239 = vld [vmem:[#allocation8 + $0x3e8] sm:$0xff]
    %v240 = vld [vmem:[#allocation8 + $0x3f0] sm:$0xff]
    %v241 = vld [vmem:[#allocation8 + $0x3f8] sm:$0xff]
    %v242 = vld [vmem:[#allocation8 + $0x400] sm:$0xff]
    %v243 = vld [vmem:[#allocation8 + $0x408] sm:$0xff]
    %v244 = vld [vmem:[#allocation8 + $0x410] sm:$0xff]
    %v245 = vld [vmem:[#allocation8 + $0x418] sm:$0xff]
    %v246 = vld [vmem:[#allocation8 + $0x420] sm:$0xff]
    %v247 = vld [vmem:[#allocation8 + $0x428] sm:$0xff]
    %v248 = vld [vmem:[#allocation8 + $0x430] sm:$0xff]
    %v249 = vld [vmem:[#allocation8 + $0x438] sm:$0xff]
    %v250 = vld [vmem:[#allocation8 + $0x440] sm:$0xff]
    %v251 = vld [vmem:[#allocation8 + $0x448] sm:$0xff]
    %v252 = vld [vmem:[#allocation8 + $0x450] sm:$0xff]
    %v253 = vld [vmem:[#allocation8 + $0x458] sm:$0xff]
    %v254 = vld [vmem:[#allocation8 + $0x460] sm:$0xff]
    %v255 = vld [vmem:[#allocation8 + $0x468] sm:$0xff]
    %v256 = vld [vmem:[#allocation8 + $0x470] sm:$0xff]
    %v257 = vld [vmem:[#allocation8 + $0x478] sm:$0xff]
    %v258 = vld [vmem:[#allocation8 + $0x480] sm:$0xff]
    %v259 = vld [vmem:[#allocation8 + $0x488] sm:$0xff]
    %v260 = vld [vmem:[#allocation8 + $0x490] sm:$0xff]
    %v261 = vld [vmem:[#allocation8 + $0x498] sm:$0xff]
    %v262 = vld [vmem:[#allocation8 + $0x4a0] sm:$0xff]
    %v263 = vld [vmem:[#allocation8 + $0x4a8] sm:$0xff]
    %v264 = vld [vmem:[#allocation8 + $0x4b0] sm:$0xff]
    %v265 = vld [vmem:[#allocation8 + $0x4b8] sm:$0xff]
    %v266 = vld [vmem:[#allocation8 + $0x4c0] sm:$0xff]
    %v267 = vld [vmem:[#allocation8 + $0x4c8] sm:$0xff]
    %v268 = vld [vmem:[#allocation8 + $0x4d0] sm:$0xff]
    %v269 = vld [vmem:[#allocation8 + $0x4d8] sm:$0xff]
    %v270 = vld [vmem:[#allocation8 + $0x4e0] sm:$0xff]
    %v271 = vld [vmem:[#allocation8 + $0x4e8] sm:$0xff]
    %v272 = vld [vmem:[#allocation8 + $0x4f0] sm:$0xff]
    %v273 = vld [vmem:[#allocation8 + $0x4f8] sm:$0xff]
    %v274 = vld [vmem:[#allocation8 + $0x500] sm:$0xff]
    %v275 = vld [vmem:[#allocation8 + $0x508] sm:$0xff]
    %v276 = vld [vmem:[#allocation8 + $0x510] sm:$0xff]
    %v277 = vld [vmem:[#allocation8 + $0x518] sm:$0xff]
    %v278 = vld [vmem:[#allocation8 + $0x520] sm:$0xff]
    %v279 = vld [vmem:[#allocation8 + $0x528] sm:$0xff]
    %v280 = vld [vmem:[#allocation8 + $0x530] sm:$0xff]
    %v281 = vld [vmem:[#allocation8 + $0x538] sm:$0xff]
    %v282 = vld [vmem:[#allocation8 + $0x540] sm:$0xff]
    %v283 = vld [vmem:[#allocation8 + $0x548] sm:$0xff]
    %v284 = vld [vmem:[#allocation8 + $0x550] sm:$0xff]
    %v285 = vld [vmem:[#allocation8 + $0x558] sm:$0xff]
    %v286 = vld [vmem:[#allocation8 + $0x560] sm:$0xff]
    %v287 = vld [vmem:[#allocation8 + $0x568] sm:$0xff]
    %v288 = vld [vmem:[#allocation8 + $0x570] sm:$0xff]
    %v289 = vld [vmem:[#allocation8 + $0x578] sm:$0xff]
    %v290 = vld [vmem:[#allocation8 + $0x580] sm:$0xff]
    %v291 = vld [vmem:[#allocation8 + $0x588] sm:$0xff]
    %v292 = vld [vmem:[#allocation8 + $0x590] sm:$0xff]
    %v293 = vld [vmem:[#allocation8 + $0x598] sm:$0xff]
    %v294 = vld [vmem:[#allocation8 + $0x5a0] sm:$0xff]
    %v295 = vld [vmem:[#allocation8 + $0x5a8] sm:$0xff]
    %v296 = vld [vmem:[#allocation8 + $0x5b0] sm:$0xff]
    %v297 = vld [vmem:[#allocation8 + $0x5b8] sm:$0xff]
    %v298 = vld [vmem:[#allocation8 + $0x5c0] sm:$0xff]
    %v299 = vld [vmem:[#allocation8 + $0x5c8] sm:$0xff]
    %v300 = vld [vmem:[#allocation8 + $0x5d0] sm:$0xff]
    %v301 = vld [vmem:[#allocation8 + $0x5d8] sm:$0xff]
    %v302 = vld [vmem:[#allocation8 + $0x5e0] sm:$0xff]
    %v303 = vld [vmem:[#allocation8 + $0x5e8] sm:$0xff]
    %v304 = vld [vmem:[#allocation8 + $0x5f0] sm:$0xff]
    %v305 = vld [vmem:[#allocation8 + $0x5f8] sm:$0xff]
    %v306 = vld [vmem:[#allocation8 + $0x600] sm:$0xff]
    %v307 = vld [vmem:[#allocation8 + $0x608] sm:$0xff]
    %v308 = vld [vmem:[#allocation8 + $0x610] sm:$0xff]
    %v309 = vld [vmem:[#allocation8 + $0x618] sm:$0xff]
    %v310 = vld [vmem:[#allocation8 + $0x620] sm:$0xff]
    %v311 = vld [vmem:[#allocation8 + $0x628] sm:$0xff]
    %v312 = vld [vmem:[#allocation8 + $0x630] sm:$0xff]
    %v313 = vld [vmem:[#allocation8 + $0x638] sm:$0xff]
    %v314 = vld [vmem:[#allocation8 + $0x640] sm:$0xff]
    %v315 = vld [vmem:[#allocation8 + $0x648] sm:$0xff]
    %v316 = vld [vmem:[#allocation8 + $0x650] sm:$0xff]
    %v317 = vld [vmem:[#allocation8 + $0x658] sm:$0xff]
    %v318 = vld [vmem:[#allocation8 + $0x660] sm:$0xff]
    %v319 = vld [vmem:[#allocation8 + $0x668] sm:$0xff]
    %v320 = vld [vmem:[#allocation8 + $0x670] sm:$0xff]
    %v321 = vld [vmem:[#allocation8 + $0x678] sm:$0xff]
    %v322 = vld [vmem:[#allocation8 + $0x680] sm:$0xff]
    %v323 = vld [vmem:[#allocation8 + $0x688] sm:$0xff]
    %v324 = vld [vmem:[#allocation8 + $0x690] sm:$0xff]
    %v325 = vld [vmem:[#allocation8 + $0x698] sm:$0xff]
    %v326 = vld [vmem:[#allocation8 + $0x6a0] sm:$0xff]
    %v327 = vld [vmem:[#allocation8 + $0x6a8] sm:$0xff]
    %v328 = vld [vmem:[#allocation8 + $0x6b0] sm:$0xff]
    %v329 = vld [vmem:[#allocation8 + $0x6b8] sm:$0xff]
    %v330 = vld [vmem:[#allocation8 + $0x6c0] sm:$0xff]
    %v331 = vld [vmem:[#allocation8 + $0x6c8] sm:$0xff]
    %v332 = vld [vmem:[#allocation8 + $0x6d0] sm:$0xff]
    %v333 = vld [vmem:[#allocation8 + $0x6d8] sm:$0xff]
    %v334 = vld [vmem:[#allocation8 + $0x6e0] sm:$0xff]
    %v335 = vld [vmem:[#allocation8 + $0x6e8] sm:$0xff]
    %v336 = vld [vmem:[#allocation8 + $0x6f0] sm:$0xff]
    %v337 = vld [vmem:[#allocation8 + $0x6f8] sm:$0xff]
    %v338 = vld [vmem:[#allocation8 + $0x700] sm:$0xff]
    %v339 = vld [vmem:[#allocation8 + $0x708] sm:$0xff]
    %v340 = vld [vmem:[#allocation8 + $0x710] sm:$0xff]
    %v341 = vld [vmem:[#allocation8 + $0x718] sm:$0xff]
    %v342 = vld [vmem:[#allocation8 + $0x720] sm:$0xff]
    %v343 = vld [vmem:[#allocation8 + $0x728] sm:$0xff]
    %v344 = vld [vmem:[#allocation8 + $0x730] sm:$0xff]
    %v345 = vld [vmem:[#allocation8 + $0x738] sm:$0xff]
    %v346 = vld [vmem:[#allocation8 + $0x740] sm:$0xff]
    %v347 = vld [vmem:[#allocation8 + $0x748] sm:$0xff]
    %v348 = vld [vmem:[#allocation8 + $0x750] sm:$0xff]
    %v349 = vld [vmem:[#allocation8 + $0x758] sm:$0xff]
    %v350 = vld [vmem:[#allocation8 + $0x760] sm:$0xff]
    %v351 = vld [vmem:[#allocation8 + $0x768] sm:$0xff]
    %v352 = vld [vmem:[#allocation8 + $0x770] sm:$0xff]
    %v353 = vld [vmem:[#allocation8 + $0x778] sm:$0xff]
    %v354 = vld [vmem:[#allocation8 + $0x780] sm:$0xff]
    %v355 = vld [vmem:[#allocation8 + $0x788] sm:$0xff]
    %v356 = vld [vmem:[#allocation8 + $0x790] sm:$0xff]
    %v357 = vld [vmem:[#allocation8 + $0x798] sm:$0xff]
    %v358 = vld [vmem:[#allocation8 + $0x7a0] sm:$0xff]
    %v359 = vld [vmem:[#allocation8 + $0x7a8] sm:$0xff]
    %v360 = vld [vmem:[#allocation8 + $0x7b0] sm:$0xff]
    %v361 = vld [vmem:[#allocation8 + $0x7b8] sm:$0xff]
    %v362 = vld [vmem:[#allocation8 + $0x7c0] sm:$0xff]
    %v363 = vld [vmem:[#allocation8 + $0x7c8] sm:$0xff]
    %v364 = vld [vmem:[#allocation8 + $0x7d0] sm:$0xff]
    %v365 = vld [vmem:[#allocation8 + $0x7d8] sm:$0xff]
    %v366 = vld [vmem:[#allocation8 + $0x7e0] sm:$0xff]
    %v367 = vld [vmem:[#allocation8 + $0x7e8] sm:$0xff]
    %v368 = vld [vmem:[#allocation8 + $0x7f0] sm:$0xff]
    %v369 = vld [vmem:[#allocation8 + $0x7f8] sm:$0xff]
    %v370 = vld [vmem:[#allocation10] sm:$0xff]
    %v372 = vperm.slane %v370, 0
    %v373 = vperm.slane %v370, 1
    %v374 = vperm.slane %v370, 2
    %v375 = vperm.slane %v370, 3
    %v376 = vperm.slane %v370, 4
    %v377 = vperm.slane %v370, 5
    %v378 = vperm.slane %v370, 6
    %v379 = vperm.slane %v370, 7
    %v644 = vunpack.c.l.b16 %v114
    %v645 = vunpack.c.h.b16 %v114
    %v646 = vunpack.c.l.b16 %v115
    %v647 = vunpack.c.h.b16 %v115
    %v648 = vunpack.c.l.b16 %v116
    %v649 = vunpack.c.h.b16 %v116
    %v650 = vunpack.c.l.b16 %v117
    %v651 = vunpack.c.h.b16 %v117
    %v652 = vunpack.c.l.b16 %v118
    %v653 = vunpack.c.h.b16 %v118
    %v654 = vunpack.c.l.b16 %v119
    %v655 = vunpack.c.h.b16 %v119
    %v656 = vunpack.c.l.b16 %v120
    %v657 = vunpack.c.h.b16 %v120
    %v658 = vunpack.c.l.b16 %v121
    %v659 = vunpack.c.h.b16 %v121
    %v660 = vunpack.c.l.b16 %v122
    %v661 = vunpack.c.h.b16 %v122
    %v662 = vunpack.c.l.b16 %v123
    %v663 = vunpack.c.h.b16 %v123
    %v664 = vunpack.c.l.b16 %v124
    %v665 = vunpack.c.h.b16 %v124
    %v666 = vunpack.c.l.b16 %v125
    %v667 = vunpack.c.h.b16 %v125
    %v668 = vunpack.c.l.b16 %v126
    %v669 = vunpack.c.h.b16 %v126
    %v670 = vunpack.c.l.b16 %v127
    %v671 = vunpack.c.h.b16 %v127
    %v672 = vunpack.c.l.b16 %v128
    %v673 = vunpack.c.h.b16 %v128
    %v674 = vunpack.c.l.b16 %v129
    %v675 = vunpack.c.h.b16 %v129
    %v676 = vunpack.c.l.b16 %v130
    %v677 = vunpack.c.h.b16 %v130
    %v678 = vunpack.c.l.b16 %v131
    %v679 = vunpack.c.h.b16 %v131
    %v680 = vunpack.c.l.b16 %v132
    %v681 = vunpack.c.h.b16 %v132
    %v682 = vunpack.c.l.b16 %v133
    %v683 = vunpack.c.h.b16 %v133
    %v684 = vunpack.c.l.b16 %v134
    %v685 = vunpack.c.h.b16 %v134
    %v686 = vunpack.c.l.b16 %v135
    %v687 = vunpack.c.h.b16 %v135
    %v688 = vunpack.c.l.b16 %v136
    %v689 = vunpack.c.h.b16 %v136
    %v690 = vunpack.c.l.b16 %v137
    %v691 = vunpack.c.h.b16 %v137
    %v692 = vunpack.c.l.b16 %v138
    %v693 = vunpack.c.h.b16 %v138
    %v694 = vunpack.c.l.b16 %v139
    %v695 = vunpack.c.h.b16 %v139
    %v696 = vunpack.c.l.b16 %v140
    %v697 = vunpack.c.h.b16 %v140
    %v698 = vunpack.c.l.b16 %v141
    %v699 = vunpack.c.h.b16 %v141
    %v700 = vunpack.c.l.b16 %v142
    %v701 = vunpack.c.h.b16 %v142
    %v702 = vunpack.c.l.b16 %v143
    %v703 = vunpack.c.h.b16 %v143
    %v704 = vunpack.c.l.b16 %v144
    %v705 = vunpack.c.h.b16 %v144
    %v706 = vunpack.c.l.b16 %v145
    %v707 = vunpack.c.h.b16 %v145
    %v708 = vunpack.c.l.b16 %v146
    %v709 = vunpack.c.h.b16 %v146
    %v710 = vunpack.c.l.b16 %v147
    %v711 = vunpack.c.h.b16 %v147
    %v712 = vunpack.c.l.b16 %v148
    %v713 = vunpack.c.h.b16 %v148
    %v714 = vunpack.c.l.b16 %v149
    %v715 = vunpack.c.h.b16 %v149
    %v716 = vunpack.c.l.b16 %v150
    %v717 = vunpack.c.h.b16 %v150
    %v718 = vunpack.c.l.b16 %v151
    %v719 = vunpack.c.h.b16 %v151
    %v720 = vunpack.c.l.b16 %v152
    %v721 = vunpack.c.h.b16 %v152
    %v722 = vunpack.c.l.b16 %v153
    %v723 = vunpack.c.h.b16 %v153
    %v724 = vunpack.c.l.b16 %v154
    %v725 = vunpack.c.h.b16 %v154
    %v726 = vunpack.c.l.b16 %v155
    %v727 = vunpack.c.h.b16 %v155
    %v728 = vunpack.c.l.b16 %v156
    %v729 = vunpack.c.h.b16 %v156
    %v730 = vunpack.c.l.b16 %v157
    %v731 = vunpack.c.h.b16 %v157
    %v732 = vunpack.c.l.b16 %v158
    %v733 = vunpack.c.h.b16 %v158
    %v734 = vunpack.c.l.b16 %v159
    %v735 = vunpack.c.h.b16 %v159
    %v736 = vunpack.c.l.b16 %v160
    %v737 = vunpack.c.h.b16 %v160
    %v738 = vunpack.c.l.b16 %v161
    %v739 = vunpack.c.h.b16 %v161
    %v740 = vunpack.c.l.b16 %v162
    %v741 = vunpack.c.h.b16 %v162
    %v742 = vunpack.c.l.b16 %v163
    %v743 = vunpack.c.h.b16 %v163
    %v744 = vunpack.c.l.b16 %v164
    %v745 = vunpack.c.h.b16 %v164
    %v746 = vunpack.c.l.b16 %v165
    %v747 = vunpack.c.h.b16 %v165
    %v748 = vunpack.c.l.b16 %v166
    %v749 = vunpack.c.h.b16 %v166
    %v750 = vunpack.c.l.b16 %v167
    %v751 = vunpack.c.h.b16 %v167
    %v752 = vunpack.c.l.b16 %v168
    %v753 = vunpack.c.h.b16 %v168
    %v754 = vunpack.c.l.b16 %v169
    %v755 = vunpack.c.h.b16 %v169
    %v756 = vunpack.c.l.b16 %v170
    %v757 = vunpack.c.h.b16 %v170
    %v758 = vunpack.c.l.b16 %v171
    %v759 = vunpack.c.h.b16 %v171
    %v760 = vunpack.c.l.b16 %v172
    %v761 = vunpack.c.h.b16 %v172
    %v762 = vunpack.c.l.b16 %v173
    %v763 = vunpack.c.h.b16 %v173
    %v764 = vunpack.c.l.b16 %v174
    %v765 = vunpack.c.h.b16 %v174
    %v766 = vunpack.c.l.b16 %v175
    %v767 = vunpack.c.h.b16 %v175
    %v768 = vunpack.c.l.b16 %v176
    %v769 = vunpack.c.h.b16 %v176
    %v770 = vunpack.c.l.b16 %v177
    %v771 = vunpack.c.h.b16 %v177
    %v772 = vunpack.c.l.b16 %v178
    %v773 = vunpack.c.h.b16 %v178
    %v774 = vunpack.c.l.b16 %v179
    %v775 = vunpack.c.h.b16 %v179
    %v776 = vunpack.c.l.b16 %v180
    %v777 = vunpack.c.h.b16 %v180
    %v778 = vunpack.c.l.b16 %v181
    %v779 = vunpack.c.h.b16 %v181
    %v780 = vunpack.c.l.b16 %v182
    %v781 = vunpack.c.h.b16 %v182
    %v782 = vunpack.c.l.b16 %v183
    %v783 = vunpack.c.h.b16 %v183
    %v784 = vunpack.c.l.b16 %v184
    %v785 = vunpack.c.h.b16 %v184
    %v786 = vunpack.c.l.b16 %v185
    %v787 = vunpack.c.h.b16 %v185
    %v788 = vunpack.c.l.b16 %v186
    %v789 = vunpack.c.h.b16 %v186
    %v790 = vunpack.c.l.b16 %v187
    %v791 = vunpack.c.h.b16 %v187
    %v792 = vunpack.c.l.b16 %v188
    %v793 = vunpack.c.h.b16 %v188
    %v794 = vunpack.c.l.b16 %v189
    %v795 = vunpack.c.h.b16 %v189
    %v796 = vunpack.c.l.b16 %v190
    %v797 = vunpack.c.h.b16 %v190
    %v798 = vunpack.c.l.b16 %v191
    %v799 = vunpack.c.h.b16 %v191
    %v800 = vunpack.c.l.b16 %v192
    %v801 = vunpack.c.h.b16 %v192
    %v802 = vunpack.c.l.b16 %v193
    %v803 = vunpack.c.h.b16 %v193
    %v804 = vunpack.c.l.b16 %v194
    %v805 = vunpack.c.h.b16 %v194
    %v806 = vunpack.c.l.b16 %v195
    %v807 = vunpack.c.h.b16 %v195
    %v808 = vunpack.c.l.b16 %v196
    %v809 = vunpack.c.h.b16 %v196
    %v810 = vunpack.c.l.b16 %v197
    %v811 = vunpack.c.h.b16 %v197
    %v812 = vunpack.c.l.b16 %v198
    %v813 = vunpack.c.h.b16 %v198
    %v814 = vunpack.c.l.b16 %v199
    %v815 = vunpack.c.h.b16 %v199
    %v816 = vunpack.c.l.b16 %v200
    %v817 = vunpack.c.h.b16 %v200
    %v818 = vunpack.c.l.b16 %v201
    %v819 = vunpack.c.h.b16 %v201
    %v820 = vunpack.c.l.b16 %v202
    %v821 = vunpack.c.h.b16 %v202
    %v822 = vunpack.c.l.b16 %v203
    %v823 = vunpack.c.h.b16 %v203
    %v824 = vunpack.c.l.b16 %v204
    %v825 = vunpack.c.h.b16 %v204
    %v826 = vunpack.c.l.b16 %v205
    %v827 = vunpack.c.h.b16 %v205
    %v828 = vunpack.c.l.b16 %v206
    %v829 = vunpack.c.h.b16 %v206
    %v830 = vunpack.c.l.b16 %v207
    %v831 = vunpack.c.h.b16 %v207
    %v832 = vunpack.c.l.b16 %v208
    %v833 = vunpack.c.h.b16 %v208
    %v834 = vunpack.c.l.b16 %v209
    %v835 = vunpack.c.h.b16 %v209
    %v836 = vunpack.c.l.b16 %v210
    %v837 = vunpack.c.h.b16 %v210
    %v838 = vunpack.c.l.b16 %v211
    %v839 = vunpack.c.h.b16 %v211
    %v840 = vunpack.c.l.b16 %v212
    %v841 = vunpack.c.h.b16 %v212
    %v842 = vunpack.c.l.b16 %v213
    %v843 = vunpack.c.h.b16 %v213
    %v844 = vunpack.c.l.b16 %v214
    %v845 = vunpack.c.h.b16 %v214
    %v846 = vunpack.c.l.b16 %v215
    %v847 = vunpack.c.h.b16 %v215
    %v848 = vunpack.c.l.b16 %v216
    %v849 = vunpack.c.h.b16 %v216
    %v850 = vunpack.c.l.b16 %v217
    %v851 = vunpack.c.h.b16 %v217
    %v852 = vunpack.c.l.b16 %v218
    %v853 = vunpack.c.h.b16 %v218
    %v854 = vunpack.c.l.b16 %v219
    %v855 = vunpack.c.h.b16 %v219
    %v856 = vunpack.c.l.b16 %v220
    %v857 = vunpack.c.h.b16 %v220
    %v858 = vunpack.c.l.b16 %v221
    %v859 = vunpack.c.h.b16 %v221
    %v860 = vunpack.c.l.b16 %v222
    %v861 = vunpack.c.h.b16 %v222
    %v862 = vunpack.c.l.b16 %v223
    %v863 = vunpack.c.h.b16 %v223
    %v864 = vunpack.c.l.b16 %v224
    %v865 = vunpack.c.h.b16 %v224
    %v866 = vunpack.c.l.b16 %v225
    %v867 = vunpack.c.h.b16 %v225
    %v868 = vunpack.c.l.b16 %v226
    %v869 = vunpack.c.h.b16 %v226
    %v870 = vunpack.c.l.b16 %v227
    %v871 = vunpack.c.h.b16 %v227
    %v872 = vunpack.c.l.b16 %v228
    %v873 = vunpack.c.h.b16 %v228
    %v874 = vunpack.c.l.b16 %v229
    %v875 = vunpack.c.h.b16 %v229
    %v876 = vunpack.c.l.b16 %v230
    %v877 = vunpack.c.h.b16 %v230
    %v878 = vunpack.c.l.b16 %v231
    %v879 = vunpack.c.h.b16 %v231
    %v880 = vunpack.c.l.b16 %v232
    %v881 = vunpack.c.h.b16 %v232
    %v882 = vunpack.c.l.b16 %v233
    %v883 = vunpack.c.h.b16 %v233
    %v884 = vunpack.c.l.b16 %v234
    %v885 = vunpack.c.h.b16 %v234
    %v886 = vunpack.c.l.b16 %v235
    %v887 = vunpack.c.h.b16 %v235
    %v888 = vunpack.c.l.b16 %v236
    %v889 = vunpack.c.h.b16 %v236
    %v890 = vunpack.c.l.b16 %v237
    %v891 = vunpack.c.h.b16 %v237
    %v892 = vunpack.c.l.b16 %v238
    %v893 = vunpack.c.h.b16 %v238
    %v894 = vunpack.c.l.b16 %v239
    %v895 = vunpack.c.h.b16 %v239
    %v896 = vunpack.c.l.b16 %v240
    %v897 = vunpack.c.h.b16 %v240
    %v898 = vunpack.c.l.b16 %v241
    %v899 = vunpack.c.h.b16 %v241
    %v900 = vunpack.c.l.b16 %v242
    %v901 = vunpack.c.h.b16 %v242
    %v902 = vunpack.c.l.b16 %v243
    %v903 = vunpack.c.h.b16 %v243
    %v904 = vunpack.c.l.b16 %v244
    %v905 = vunpack.c.h.b16 %v244
    %v906 = vunpack.c.l.b16 %v245
    %v907 = vunpack.c.h.b16 %v245
    %v908 = vunpack.c.l.b16 %v246
    %v909 = vunpack.c.h.b16 %v246
    %v910 = vunpack.c.l.b16 %v247
    %v911 = vunpack.c.h.b16 %v247
    %v912 = vunpack.c.l.b16 %v248
    %v913 = vunpack.c.h.b16 %v248
    %v914 = vunpack.c.l.b16 %v249
    %v915 = vunpack.c.h.b16 %v249
    %v916 = vunpack.c.l.b16 %v250
    %v917 = vunpack.c.h.b16 %v250
    %v918 = vunpack.c.l.b16 %v251
    %v919 = vunpack.c.h.b16 %v251
    %v920 = vunpack.c.l.b16 %v252
    %v921 = vunpack.c.h.b16 %v252
    %v922 = vunpack.c.l.b16 %v253
    %v923 = vunpack.c.h.b16 %v253
    %v924 = vunpack.c.l.b16 %v254
    %v925 = vunpack.c.h.b16 %v254
    %v926 = vunpack.c.l.b16 %v255
    %v927 = vunpack.c.h.b16 %v255
    %v928 = vunpack.c.l.b16 %v256
    %v929 = vunpack.c.h.b16 %v256
    %v930 = vunpack.c.l.b16 %v257
    %v931 = vunpack.c.h.b16 %v257
    %v932 = vunpack.c.l.b16 %v258
    %v933 = vunpack.c.h.b16 %v258
    %v934 = vunpack.c.l.b16 %v259
    %v935 = vunpack.c.h.b16 %v259
    %v936 = vunpack.c.l.b16 %v260
    %v937 = vunpack.c.h.b16 %v260
    %v938 = vunpack.c.l.b16 %v261
    %v939 = vunpack.c.h.b16 %v261
    %v940 = vunpack.c.l.b16 %v262
    %v941 = vunpack.c.h.b16 %v262
    %v942 = vunpack.c.l.b16 %v263
    %v943 = vunpack.c.h.b16 %v263
    %v944 = vunpack.c.l.b16 %v264
    %v945 = vunpack.c.h.b16 %v264
    %v946 = vunpack.c.l.b16 %v265
    %v947 = vunpack.c.h.b16 %v265
    %v948 = vunpack.c.l.b16 %v266
    %v949 = vunpack.c.h.b16 %v266
    %v950 = vunpack.c.l.b16 %v267
    %v951 = vunpack.c.h.b16 %v267
    %v952 = vunpack.c.l.b16 %v268
    %v953 = vunpack.c.h.b16 %v268
    %v954 = vunpack.c.l.b16 %v269
    %v955 = vunpack.c.h.b16 %v269
    %v956 = vunpack.c.l.b16 %v270
    %v957 = vunpack.c.h.b16 %v270
    %v958 = vunpack.c.l.b16 %v271
    %v959 = vunpack.c.h.b16 %v271
    %v960 = vunpack.c.l.b16 %v272
    %v961 = vunpack.c.h.b16 %v272
    %v962 = vunpack.c.l.b16 %v273
    %v963 = vunpack.c.h.b16 %v273
    %v964 = vunpack.c.l.b16 %v274
    %v965 = vunpack.c.h.b16 %v274
    %v966 = vunpack.c.l.b16 %v275
    %v967 = vunpack.c.h.b16 %v275
    %v968 = vunpack.c.l.b16 %v276
    %v969 = vunpack.c.h.b16 %v276
    %v970 = vunpack.c.l.b16 %v277
    %v971 = vunpack.c.h.b16 %v277
    %v972 = vunpack.c.l.b16 %v278
    %v973 = vunpack.c.h.b16 %v278
    %v974 = vunpack.c.l.b16 %v279
    %v975 = vunpack.c.h.b16 %v279
    %v976 = vunpack.c.l.b16 %v280
    %v977 = vunpack.c.h.b16 %v280
    %v978 = vunpack.c.l.b16 %v281
    %v979 = vunpack.c.h.b16 %v281
    %v980 = vunpack.c.l.b16 %v282
    %v981 = vunpack.c.h.b16 %v282
    %v982 = vunpack.c.l.b16 %v283
    %v983 = vunpack.c.h.b16 %v283
    %v984 = vunpack.c.l.b16 %v284
    %v985 = vunpack.c.h.b16 %v284
    %v986 = vunpack.c.l.b16 %v285
    %v987 = vunpack.c.h.b16 %v285
    %v988 = vunpack.c.l.b16 %v286
    %v989 = vunpack.c.h.b16 %v286
    %v990 = vunpack.c.l.b16 %v287
    %v991 = vunpack.c.h.b16 %v287
    %v992 = vunpack.c.l.b16 %v288
    %v993 = vunpack.c.h.b16 %v288
    %v994 = vunpack.c.l.b16 %v289
    %v995 = vunpack.c.h.b16 %v289
    %v996 = vunpack.c.l.b16 %v290
    %v997 = vunpack.c.h.b16 %v290
    %v998 = vunpack.c.l.b16 %v291
    %v999 = vunpack.c.h.b16 %v291
    %v1000 = vunpack.c.l.b16 %v292
    %v1001 = vunpack.c.h.b16 %v292
    %v1002 = vunpack.c.l.b16 %v293
    %v1003 = vunpack.c.h.b16 %v293
    %v1004 = vunpack.c.l.b16 %v294
    %v1005 = vunpack.c.h.b16 %v294
    %v1006 = vunpack.c.l.b16 %v295
    %v1007 = vunpack.c.h.b16 %v295
    %v1008 = vunpack.c.l.b16 %v296
    %v1009 = vunpack.c.h.b16 %v296
    %v1010 = vunpack.c.l.b16 %v297
    %v1011 = vunpack.c.h.b16 %v297
    %v1012 = vunpack.c.l.b16 %v298
    %v1013 = vunpack.c.h.b16 %v298
    %v1014 = vunpack.c.l.b16 %v299
    %v1015 = vunpack.c.h.b16 %v299
    %v1016 = vunpack.c.l.b16 %v300
    %v1017 = vunpack.c.h.b16 %v300
    %v1018 = vunpack.c.l.b16 %v301
    %v1019 = vunpack.c.h.b16 %v301
    %v1020 = vunpack.c.l.b16 %v302
    %v1021 = vunpack.c.h.b16 %v302
    %v1022 = vunpack.c.l.b16 %v303
    %v1023 = vunpack.c.h.b16 %v303
    %v1024 = vunpack.c.l.b16 %v304
    %v1025 = vunpack.c.h.b16 %v304
    %v1026 = vunpack.c.l.b16 %v305
    %v1027 = vunpack.c.h.b16 %v305
    %v1028 = vunpack.c.l.b16 %v306
    %v1029 = vunpack.c.h.b16 %v306
    %v1030 = vunpack.c.l.b16 %v307
    %v1031 = vunpack.c.h.b16 %v307
    %v1032 = vunpack.c.l.b16 %v308
    %v1033 = vunpack.c.h.b16 %v308
    %v1034 = vunpack.c.l.b16 %v309
    %v1035 = vunpack.c.h.b16 %v309
    %v1036 = vunpack.c.l.b16 %v310
    %v1037 = vunpack.c.h.b16 %v310
    %v1038 = vunpack.c.l.b16 %v311
    %v1039 = vunpack.c.h.b16 %v311
    %v1040 = vunpack.c.l.b16 %v312
    %v1041 = vunpack.c.h.b16 %v312
    %v1042 = vunpack.c.l.b16 %v313
    %v1043 = vunpack.c.h.b16 %v313
    %v1044 = vunpack.c.l.b16 %v314
    %v1045 = vunpack.c.h.b16 %v314
    %v1046 = vunpack.c.l.b16 %v315
    %v1047 = vunpack.c.h.b16 %v315
    %v1048 = vunpack.c.l.b16 %v316
    %v1049 = vunpack.c.h.b16 %v316
    %v1050 = vunpack.c.l.b16 %v317
    %v1051 = vunpack.c.h.b16 %v317
    %v1052 = vunpack.c.l.b16 %v318
    %v1053 = vunpack.c.h.b16 %v318
    %v1054 = vunpack.c.l.b16 %v319
    %v1055 = vunpack.c.h.b16 %v319
    %v1056 = vunpack.c.l.b16 %v320
    %v1057 = vunpack.c.h.b16 %v320
    %v1058 = vunpack.c.l.b16 %v321
    %v1059 = vunpack.c.h.b16 %v321
    %v1060 = vunpack.c.l.b16 %v322
    %v1061 = vunpack.c.h.b16 %v322
    %v1062 = vunpack.c.l.b16 %v323
    %v1063 = vunpack.c.h.b16 %v323
    %v1064 = vunpack.c.l.b16 %v324
    %v1065 = vunpack.c.h.b16 %v324
    %v1066 = vunpack.c.l.b16 %v325
    %v1067 = vunpack.c.h.b16 %v325
    %v1068 = vunpack.c.l.b16 %v326
    %v1069 = vunpack.c.h.b16 %v326
    %v1070 = vunpack.c.l.b16 %v327
    %v1071 = vunpack.c.h.b16 %v327
    %v1072 = vunpack.c.l.b16 %v328
    %v1073 = vunpack.c.h.b16 %v328
    %v1074 = vunpack.c.l.b16 %v329
    %v1075 = vunpack.c.h.b16 %v329
    %v1076 = vunpack.c.l.b16 %v330
    %v1077 = vunpack.c.h.b16 %v330
    %v1078 = vunpack.c.l.b16 %v331
    %v1079 = vunpack.c.h.b16 %v331
    %v1080 = vunpack.c.l.b16 %v332
    %v1081 = vunpack.c.h.b16 %v332
    %v1082 = vunpack.c.l.b16 %v333
    %v1083 = vunpack.c.h.b16 %v333
    %v1084 = vunpack.c.l.b16 %v334
    %v1085 = vunpack.c.h.b16 %v334
    %v1086 = vunpack.c.l.b16 %v335
    %v1087 = vunpack.c.h.b16 %v335
    %v1088 = vunpack.c.l.b16 %v336
    %v1089 = vunpack.c.h.b16 %v336
    %v1090 = vunpack.c.l.b16 %v337
    %v1091 = vunpack.c.h.b16 %v337
    %v1092 = vunpack.c.l.b16 %v338
    %v1093 = vunpack.c.h.b16 %v338
    %v1094 = vunpack.c.l.b16 %v339
    %v1095 = vunpack.c.h.b16 %v339
    %v1096 = vunpack.c.l.b16 %v340
    %v1097 = vunpack.c.h.b16 %v340
    %v1098 = vunpack.c.l.b16 %v341
    %v1099 = vunpack.c.h.b16 %v341
    %v1100 = vunpack.c.l.b16 %v342
    %v1101 = vunpack.c.h.b16 %v342
    %v1102 = vunpack.c.l.b16 %v343
    %v1103 = vunpack.c.h.b16 %v343
    %v1104 = vunpack.c.l.b16 %v344
    %v1105 = vunpack.c.h.b16 %v344
    %v1106 = vunpack.c.l.b16 %v345
    %v1107 = vunpack.c.h.b16 %v345
    %v1108 = vunpack.c.l.b16 %v346
    %v1109 = vunpack.c.h.b16 %v346
    %v1110 = vunpack.c.l.b16 %v347
    %v1111 = vunpack.c.h.b16 %v347
    %v1112 = vunpack.c.l.b16 %v348
    %v1113 = vunpack.c.h.b16 %v348
    %v1114 = vunpack.c.l.b16 %v349
    %v1115 = vunpack.c.h.b16 %v349
    %v1116 = vunpack.c.l.b16 %v350
    %v1117 = vunpack.c.h.b16 %v350
    %v1118 = vunpack.c.l.b16 %v351
    %v1119 = vunpack.c.h.b16 %v351
    %v1120 = vunpack.c.l.b16 %v352
    %v1121 = vunpack.c.h.b16 %v352
    %v1122 = vunpack.c.l.b16 %v353
    %v1123 = vunpack.c.h.b16 %v353
    %v1124 = vunpack.c.l.b16 %v354
    %v1125 = vunpack.c.h.b16 %v354
    %v1126 = vunpack.c.l.b16 %v355
    %v1127 = vunpack.c.h.b16 %v355
    %v1128 = vunpack.c.l.b16 %v356
    %v1129 = vunpack.c.h.b16 %v356
    %v1130 = vunpack.c.l.b16 %v357
    %v1131 = vunpack.c.h.b16 %v357
    %v1132 = vunpack.c.l.b16 %v358
    %v1133 = vunpack.c.h.b16 %v358
    %v1134 = vunpack.c.l.b16 %v359
    %v1135 = vunpack.c.h.b16 %v359
    %v1136 = vunpack.c.l.b16 %v360
    %v1137 = vunpack.c.h.b16 %v360
    %v1138 = vunpack.c.l.b16 %v361
    %v1139 = vunpack.c.h.b16 %v361
    %v1140 = vunpack.c.l.b16 %v362
    %v1141 = vunpack.c.h.b16 %v362
    %v1142 = vunpack.c.l.b16 %v363
    %v1143 = vunpack.c.h.b16 %v363
    %v1144 = vunpack.c.l.b16 %v364
    %v1145 = vunpack.c.h.b16 %v364
    %v1146 = vunpack.c.l.b16 %v365
    %v1147 = vunpack.c.h.b16 %v365
    %v1148 = vunpack.c.l.b16 %v366
    %v1149 = vunpack.c.h.b16 %v366
    %v1150 = vunpack.c.l.b16 %v367
    %v1151 = vunpack.c.h.b16 %v367
    %v1152 = vunpack.c.l.b16 %v368
    %v1153 = vunpack.c.h.b16 %v368
    %v1154 = vunpack.c.l.b16 %v369
    %v1155 = vunpack.c.h.b16 %v369
    %v1156 = vpack.c.b16 %v652, %v644
    %v1157 = vpack.c.b16 %v653, %v645
    %v1158 = vpack.c.b16 %v654, %v646
    %v1159 = vpack.c.b16 %v655, %v647
    %v1160 = vpack.c.b16 %v656, %v648
    %v1161 = vpack.c.b16 %v657, %v649
    %v1162 = vpack.c.b16 %v658, %v650
    %v1163 = vpack.c.b16 %v659, %v651
    %v1164 = vpack.c.b16 %v668, %v660
    %v1165 = vpack.c.b16 %v669, %v661
    %v1166 = vpack.c.b16 %v670, %v662
    %v1167 = vpack.c.b16 %v671, %v663
    %v1168 = vpack.c.b16 %v672, %v664
    %v1169 = vpack.c.b16 %v673, %v665
    %v1170 = vpack.c.b16 %v674, %v666
    %v1171 = vpack.c.b16 %v675, %v667
    %v1172 = vpack.c.b16 %v684, %v676
    %v1173 = vpack.c.b16 %v685, %v677
    %v1174 = vpack.c.b16 %v686, %v678
    %v1175 = vpack.c.b16 %v687, %v679
    %v1176 = vpack.c.b16 %v688, %v680
    %v1177 = vpack.c.b16 %v689, %v681
    %v1178 = vpack.c.b16 %v690, %v682
    %v1179 = vpack.c.b16 %v691, %v683
    %v1180 = vpack.c.b16 %v700, %v692
    %v1181 = vpack.c.b16 %v701, %v693
    %v1182 = vpack.c.b16 %v702, %v694
    %v1183 = vpack.c.b16 %v703, %v695
    %v1184 = vpack.c.b16 %v704, %v696
    %v1185 = vpack.c.b16 %v705, %v697
    %v1186 = vpack.c.b16 %v706, %v698
    %v1187 = vpack.c.b16 %v707, %v699
    %v1188 = vpack.c.b16 %v716, %v708
    %v1189 = vpack.c.b16 %v717, %v709
    %v1190 = vpack.c.b16 %v718, %v710
    %v1191 = vpack.c.b16 %v719, %v711
    %v1192 = vpack.c.b16 %v720, %v712
    %v1193 = vpack.c.b16 %v721, %v713
    %v1194 = vpack.c.b16 %v722, %v714
    %v1195 = vpack.c.b16 %v723, %v715
    %v1196 = vpack.c.b16 %v732, %v724
    %v1197 = vpack.c.b16 %v733, %v725
    %v1198 = vpack.c.b16 %v734, %v726
    %v1199 = vpack.c.b16 %v735, %v727
    %v1200 = vpack.c.b16 %v736, %v728
    %v1201 = vpack.c.b16 %v737, %v729
    %v1202 = vpack.c.b16 %v738, %v730
    %v1203 = vpack.c.b16 %v739, %v731
    %v1204 = vpack.c.b16 %v748, %v740
    %v1205 = vpack.c.b16 %v749, %v741
    %v1206 = vpack.c.b16 %v750, %v742
    %v1207 = vpack.c.b16 %v751, %v743
    %v1208 = vpack.c.b16 %v752, %v744
    %v1209 = vpack.c.b16 %v753, %v745
    %v1210 = vpack.c.b16 %v754, %v746
    %v1211 = vpack.c.b16 %v755, %v747
    %v1212 = vpack.c.b16 %v764, %v756
    %v1213 = vpack.c.b16 %v765, %v757
    %v1214 = vpack.c.b16 %v766, %v758
    %v1215 = vpack.c.b16 %v767, %v759
    %v1216 = vpack.c.b16 %v768, %v760
    %v1217 = vpack.c.b16 %v769, %v761
    %v1218 = vpack.c.b16 %v770, %v762
    %v1219 = vpack.c.b16 %v771, %v763
    %v1220 = vpack.c.b16 %v780, %v772
    %v1221 = vpack.c.b16 %v781, %v773
    %v1222 = vpack.c.b16 %v782, %v774
    %v1223 = vpack.c.b16 %v783, %v775
    %v1224 = vpack.c.b16 %v784, %v776
    %v1225 = vpack.c.b16 %v785, %v777
    %v1226 = vpack.c.b16 %v786, %v778
    %v1227 = vpack.c.b16 %v787, %v779
    %v1228 = vpack.c.b16 %v796, %v788
    %v1229 = vpack.c.b16 %v797, %v789
    %v1230 = vpack.c.b16 %v798, %v790
    %v1231 = vpack.c.b16 %v799, %v791
    %v1232 = vpack.c.b16 %v800, %v792
    %v1233 = vpack.c.b16 %v801, %v793
    %v1234 = vpack.c.b16 %v802, %v794
    %v1235 = vpack.c.b16 %v803, %v795
    %v1236 = vpack.c.b16 %v812, %v804
    %v1237 = vpack.c.b16 %v813, %v805
    %v1238 = vpack.c.b16 %v814, %v806
    %v1239 = vpack.c.b16 %v815, %v807
    %v1240 = vpack.c.b16 %v816, %v808
    %v1241 = vpack.c.b16 %v817, %v809
    %v1242 = vpack.c.b16 %v818, %v810
    %v1243 = vpack.c.b16 %v819, %v811
    %v1244 = vpack.c.b16 %v828, %v820
    %v1245 = vpack.c.b16 %v829, %v821
    %v1246 = vpack.c.b16 %v830, %v822
    %v1247 = vpack.c.b16 %v831, %v823
    %v1248 = vpack.c.b16 %v832, %v824
    %v1249 = vpack.c.b16 %v833, %v825
    %v1250 = vpack.c.b16 %v834, %v826
    %v1251 = vpack.c.b16 %v835, %v827
    %v1252 = vpack.c.b16 %v844, %v836
    %v1253 = vpack.c.b16 %v845, %v837
    %v1254 = vpack.c.b16 %v846, %v838
    %v1255 = vpack.c.b16 %v847, %v839
    %v1256 = vpack.c.b16 %v848, %v840
    %v1257 = vpack.c.b16 %v849, %v841
    %v1258 = vpack.c.b16 %v850, %v842
    %v1259 = vpack.c.b16 %v851, %v843
    %v1260 = vpack.c.b16 %v860, %v852
    %v1261 = vpack.c.b16 %v861, %v853
    %v1262 = vpack.c.b16 %v862, %v854
    %v1263 = vpack.c.b16 %v863, %v855
    %v1264 = vpack.c.b16 %v864, %v856
    %v1265 = vpack.c.b16 %v865, %v857
    %v1266 = vpack.c.b16 %v866, %v858
    %v1267 = vpack.c.b16 %v867, %v859
    %v1268 = vpack.c.b16 %v876, %v868
    %v1269 = vpack.c.b16 %v877, %v869
    %v1270 = vpack.c.b16 %v878, %v870
    %v1271 = vpack.c.b16 %v879, %v871
    %v1272 = vpack.c.b16 %v880, %v872
    %v1273 = vpack.c.b16 %v881, %v873
    %v1274 = vpack.c.b16 %v882, %v874
    %v1275 = vpack.c.b16 %v883, %v875
    %v1276 = vpack.c.b16 %v892, %v884
    %v1277 = vpack.c.b16 %v893, %v885
    %v1278 = vpack.c.b16 %v894, %v886
    %v1279 = vpack.c.b16 %v895, %v887
    %v1280 = vpack.c.b16 %v896, %v888
    %v1281 = vpack.c.b16 %v897, %v889
    %v1282 = vpack.c.b16 %v898, %v890
    %v1283 = vpack.c.b16 %v899, %v891
    %v1284 = vpack.c.b16 %v908, %v900
    %v1285 = vpack.c.b16 %v909, %v901
    %v1286 = vpack.c.b16 %v910, %v902
    %v1287 = vpack.c.b16 %v911, %v903
    %v1288 = vpack.c.b16 %v912, %v904
    %v1289 = vpack.c.b16 %v913, %v905
    %v1290 = vpack.c.b16 %v914, %v906
    %v1291 = vpack.c.b16 %v915, %v907
    %v1292 = vpack.c.b16 %v924, %v916
    %v1293 = vpack.c.b16 %v925, %v917
    %v1294 = vpack.c.b16 %v926, %v918
    %v1295 = vpack.c.b16 %v927, %v919
    %v1296 = vpack.c.b16 %v928, %v920
    %v1297 = vpack.c.b16 %v929, %v921
    %v1298 = vpack.c.b16 %v930, %v922
    %v1299 = vpack.c.b16 %v931, %v923
    %v1300 = vpack.c.b16 %v940, %v932
    %v1301 = vpack.c.b16 %v941, %v933
    %v1302 = vpack.c.b16 %v942, %v934
    %v1303 = vpack.c.b16 %v943, %v935
    %v1304 = vpack.c.b16 %v944, %v936
    %v1305 = vpack.c.b16 %v945, %v937
    %v1306 = vpack.c.b16 %v946, %v938
    %v1307 = vpack.c.b16 %v947, %v939
    %v1308 = vpack.c.b16 %v956, %v948
    %v1309 = vpack.c.b16 %v957, %v949
    %v1310 = vpack.c.b16 %v958, %v950
    %v1311 = vpack.c.b16 %v959, %v951
    %v1312 = vpack.c.b16 %v960, %v952
    %v1313 = vpack.c.b16 %v961, %v953
    %v1314 = vpack.c.b16 %v962, %v954
    %v1315 = vpack.c.b16 %v963, %v955
    %v1316 = vpack.c.b16 %v972, %v964
    %v1317 = vpack.c.b16 %v973, %v965
    %v1318 = vpack.c.b16 %v974, %v966
    %v1319 = vpack.c.b16 %v975, %v967
    %v1320 = vpack.c.b16 %v976, %v968
    %v1321 = vpack.c.b16 %v977, %v969
    %v1322 = vpack.c.b16 %v978, %v970
    %v1323 = vpack.c.b16 %v979, %v971
    %v1324 = vpack.c.b16 %v988, %v980
    %v1325 = vpack.c.b16 %v989, %v981
    %v1326 = vpack.c.b16 %v990, %v982
    %v1327 = vpack.c.b16 %v991, %v983
    %v1328 = vpack.c.b16 %v992, %v984
    %v1329 = vpack.c.b16 %v993, %v985
    %v1330 = vpack.c.b16 %v994, %v986
    %v1331 = vpack.c.b16 %v995, %v987
    %v1332 = vpack.c.b16 %v1004, %v996
    %v1333 = vpack.c.b16 %v1005, %v997
    %v1334 = vpack.c.b16 %v1006, %v998
    %v1335 = vpack.c.b16 %v1007, %v999
    %v1336 = vpack.c.b16 %v1008, %v1000
    %v1337 = vpack.c.b16 %v1009, %v1001
    %v1338 = vpack.c.b16 %v1010, %v1002
    %v1339 = vpack.c.b16 %v1011, %v1003
    %v1340 = vpack.c.b16 %v1020, %v1012
    %v1341 = vpack.c.b16 %v1021, %v1013
    %v1342 = vpack.c.b16 %v1022, %v1014
    %v1343 = vpack.c.b16 %v1023, %v1015
    %v1344 = vpack.c.b16 %v1024, %v1016
    %v1345 = vpack.c.b16 %v1025, %v1017
    %v1346 = vpack.c.b16 %v1026, %v1018
    %v1347 = vpack.c.b16 %v1027, %v1019
    %v1348 = vpack.c.b16 %v1036, %v1028
    %v1349 = vpack.c.b16 %v1037, %v1029
    %v1350 = vpack.c.b16 %v1038, %v1030
    %v1351 = vpack.c.b16 %v1039, %v1031
    %v1352 = vpack.c.b16 %v1040, %v1032
    %v1353 = vpack.c.b16 %v1041, %v1033
    %v1354 = vpack.c.b16 %v1042, %v1034
    %v1355 = vpack.c.b16 %v1043, %v1035
    %v1356 = vpack.c.b16 %v1052, %v1044
    %v1357 = vpack.c.b16 %v1053, %v1045
    %v1358 = vpack.c.b16 %v1054, %v1046
    %v1359 = vpack.c.b16 %v1055, %v1047
    %v1360 = vpack.c.b16 %v1056, %v1048
    %v1361 = vpack.c.b16 %v1057, %v1049
    %v1362 = vpack.c.b16 %v1058, %v1050
    %v1363 = vpack.c.b16 %v1059, %v1051
    %v1364 = vpack.c.b16 %v1068, %v1060
    %v1365 = vpack.c.b16 %v1069, %v1061
    %v1366 = vpack.c.b16 %v1070, %v1062
    %v1367 = vpack.c.b16 %v1071, %v1063
    %v1368 = vpack.c.b16 %v1072, %v1064
    %v1369 = vpack.c.b16 %v1073, %v1065
    %v1370 = vpack.c.b16 %v1074, %v1066
    %v1371 = vpack.c.b16 %v1075, %v1067
    %v1372 = vpack.c.b16 %v1084, %v1076
    %v1373 = vpack.c.b16 %v1085, %v1077
    %v1374 = vpack.c.b16 %v1086, %v1078
    %v1375 = vpack.c.b16 %v1087, %v1079
    %v1376 = vpack.c.b16 %v1088, %v1080
    %v1377 = vpack.c.b16 %v1089, %v1081
    %v1378 = vpack.c.b16 %v1090, %v1082
    %v1379 = vpack.c.b16 %v1091, %v1083
    %v1380 = vpack.c.b16 %v1100, %v1092
    %v1381 = vpack.c.b16 %v1101, %v1093
    %v1382 = vpack.c.b16 %v1102, %v1094
    %v1383 = vpack.c.b16 %v1103, %v1095
    %v1384 = vpack.c.b16 %v1104, %v1096
    %v1385 = vpack.c.b16 %v1105, %v1097
    %v1386 = vpack.c.b16 %v1106, %v1098
    %v1387 = vpack.c.b16 %v1107, %v1099
    %v1388 = vpack.c.b16 %v1116, %v1108
    %v1389 = vpack.c.b16 %v1117, %v1109
    %v1390 = vpack.c.b16 %v1118, %v1110
    %v1391 = vpack.c.b16 %v1119, %v1111
    %v1392 = vpack.c.b16 %v1120, %v1112
    %v1393 = vpack.c.b16 %v1121, %v1113
    %v1394 = vpack.c.b16 %v1122, %v1114
    %v1395 = vpack.c.b16 %v1123, %v1115
    %v1396 = vpack.c.b16 %v1132, %v1124
    %v1397 = vpack.c.b16 %v1133, %v1125
    %v1398 = vpack.c.b16 %v1134, %v1126
    %v1399 = vpack.c.b16 %v1135, %v1127
    %v1400 = vpack.c.b16 %v1136, %v1128
    %v1401 = vpack.c.b16 %v1137, %v1129
    %v1402 = vpack.c.b16 %v1138, %v1130
    %v1403 = vpack.c.b16 %v1139, %v1131
    %v1404 = vpack.c.b16 %v1148, %v1140
    %v1405 = vpack.c.b16 %v1149, %v1141
    %v1406 = vpack.c.b16 %v1150, %v1142
    %v1407 = vpack.c.b16 %v1151, %v1143
    %v1408 = vpack.c.b16 %v1152, %v1144
    %v1409 = vpack.c.b16 %v1153, %v1145
    %v1410 = vpack.c.b16 %v1154, %v1146
    %v1411 = vpack.c.b16 %v1155, %v1147
    %1668 = vmatpush.bf16.msra.mxu0 %v1212
    %1669 = vmatpush.bf16.msra.mxu0 %v1204
    %1670 = vmatpush.bf16.msra.mxu0 %v1196
    %1671 = vmatpush.bf16.msra.mxu0 %v1188
    %1672 = vmatpush.bf16.msra.mxu0 %v1180
    %1673 = vmatpush.bf16.msra.mxu0 %v1172
    %1674 = vmatpush.bf16.msra.mxu0 %v1164
    %1675 = vmatpush.bf16.msra.mxu0 %v1156
    %1676 = vmatmul.bf16.gmra.mxu0 %v103
    %v1677 = vpop.f32.mrf.mxu0
    %v1678 = vadd.f32 %v372, %v1677
    %v1679 = vpop.f32.mrf.mxu0
    %1680 = vdwg.mxu0
    %1681 = vmatpush.bf16.msra.mxu0 %v1276
    %1682 = vmatpush.bf16.msra.mxu0 %v1268
    %1683 = vmatpush.bf16.msra.mxu0 %v1260
    %1684 = vmatpush.bf16.msra.mxu0 %v1252
    %1685 = vmatpush.bf16.msra.mxu0 %v1244
    %1686 = vmatpush.bf16.msra.mxu0 %v1236
    %1687 = vmatpush.bf16.msra.mxu0 %v1228
    %1688 = vmatpush.bf16.msra.mxu0 %v1220
    %1689 = vmatmul.bf16.gmra.mxu0 %v104
    %v1690 = vpop.f32.mrf.mxu0
    %v1691 = vadd.f32 %v1678, %v1690
    %v1692 = vpop.f32.mrf.mxu0
    %1693 = vdwg.mxu0
    %1694 = vmatpush.bf16.msra.mxu0 %v1340
    %1695 = vmatpush.bf16.msra.mxu0 %v1332
    %1696 = vmatpush.bf16.msra.mxu0 %v1324
    %1697 = vmatpush.bf16.msra.mxu0 %v1316
    %1698 = vmatpush.bf16.msra.mxu0 %v1308
    %1699 = vmatpush.bf16.msra.mxu0 %v1300
    %1700 = vmatpush.bf16.msra.mxu0 %v1292
    %1701 = vmatpush.bf16.msra.mxu0 %v1284
    %1702 = vmatmul.bf16.gmra.mxu0 %v110
    %v1703 = vpop.f32.mrf.mxu0
    %v1704 = vadd.f32 %v1691, %v1703
    %v1705 = vpop.f32.mrf.mxu0
    %1706 = vdwg.mxu0
    %1707 = vmatpush.bf16.msra.mxu0 %v1404
    %1708 = vmatpush.bf16.msra.mxu0 %v1396
    %1709 = vmatpush.bf16.msra.mxu0 %v1388
    %1710 = vmatpush.bf16.msra.mxu0 %v1380
    %1711 = vmatpush.bf16.msra.mxu0 %v1372
    %1712 = vmatpush.bf16.msra.mxu0 %v1364
    %1713 = vmatpush.bf16.msra.mxu0 %v1356
    %1714 = vmatpush.bf16.msra.mxu0 %v1348
    %1715 = vmatmul.bf16.gmra.mxu0 %v111
    %v1716 = vpop.f32.mrf.mxu0
    %v1717 = vadd.f32 %v1704, %v1716
    %v1718 = vpop.f32.mrf.mxu0
    %1719 = vdwg.mxu0
    %1720 = vmatpush.bf16.msra.mxu0 %v1213
    %1721 = vmatpush.bf16.msra.mxu0 %v1205
    %1722 = vmatpush.bf16.msra.mxu0 %v1197
    %1723 = vmatpush.bf16.msra.mxu0 %v1189
    %1724 = vmatpush.bf16.msra.mxu0 %v1181
    %1725 = vmatpush.bf16.msra.mxu0 %v1173
    %1726 = vmatpush.bf16.msra.mxu0 %v1165
    %1727 = vmatpush.bf16.msra.mxu0 %v1157
    %1728 = vmatmul.bf16.gmra.mxu0 %v103
    %v1729 = vpop.f32.mrf.mxu0
    %v1730 = vadd.f32 %v373, %v1729
    %v1731 = vpop.f32.mrf.mxu0
    %1732 = vdwg.mxu0
    %1733 = vmatpush.bf16.msra.mxu0 %v1277
    %1734 = vmatpush.bf16.msra.mxu0 %v1269
    %1735 = vmatpush.bf16.msra.mxu0 %v1261
    %1736 = vmatpush.bf16.msra.mxu0 %v1253
    %1737 = vmatpush.bf16.msra.mxu0 %v1245
    %1738 = vmatpush.bf16.msra.mxu0 %v1237
    %1739 = vmatpush.bf16.msra.mxu0 %v1229
    %1740 = vmatpush.bf16.msra.mxu0 %v1221
    %1741 = vmatmul.bf16.gmra.mxu0 %v104
    %v1742 = vpop.f32.mrf.mxu0
    %v1743 = vadd.f32 %v1730, %v1742
    %v1744 = vpop.f32.mrf.mxu0
    %1745 = vdwg.mxu0
    %1746 = vmatpush.bf16.msra.mxu0 %v1341
    %1747 = vmatpush.bf16.msra.mxu0 %v1333
    %1748 = vmatpush.bf16.msra.mxu0 %v1325
    %1749 = vmatpush.bf16.msra.mxu0 %v1317
    %1750 = vmatpush.bf16.msra.mxu0 %v1309
    %1751 = vmatpush.bf16.msra.mxu0 %v1301
    %1752 = vmatpush.bf16.msra.mxu0 %v1293
    %1753 = vmatpush.bf16.msra.mxu0 %v1285
    %1754 = vmatmul.bf16.gmra.mxu0 %v110
    %v1755 = vpop.f32.mrf.mxu0
    %v1756 = vadd.f32 %v1743, %v1755
    %v1757 = vpop.f32.mrf.mxu0
    %1758 = vdwg.mxu0
    %1759 = vmatpush.bf16.msra.mxu0 %v1405
    %1760 = vmatpush.bf16.msra.mxu0 %v1397
    %1761 = vmatpush.bf16.msra.mxu0 %v1389
    %1762 = vmatpush.bf16.msra.mxu0 %v1381
    %1763 = vmatpush.bf16.msra.mxu0 %v1373
    %1764 = vmatpush.bf16.msra.mxu0 %v1365
    %1765 = vmatpush.bf16.msra.mxu0 %v1357
    %1766 = vmatpush.bf16.msra.mxu0 %v1349
    %1767 = vmatmul.bf16.gmra.mxu0 %v111
    %v1768 = vpop.f32.mrf.mxu0
    %v1769 = vadd.f32 %v1756, %v1768
    %v1770 = vpop.f32.mrf.mxu0
    %1771 = vdwg.mxu0
    %1772 = vmatpush.bf16.msra.mxu0 %v1214
    %1773 = vmatpush.bf16.msra.mxu0 %v1206
    %1774 = vmatpush.bf16.msra.mxu0 %v1198
    %1775 = vmatpush.bf16.msra.mxu0 %v1190
    %1776 = vmatpush.bf16.msra.mxu0 %v1182
    %1777 = vmatpush.bf16.msra.mxu0 %v1174
    %1778 = vmatpush.bf16.msra.mxu0 %v1166
    %1779 = vmatpush.bf16.msra.mxu0 %v1158
    %1780 = vmatmul.bf16.gmra.mxu0 %v103
    %v1781 = vpop.f32.mrf.mxu0
    %v1782 = vadd.f32 %v374, %v1781
    %v1783 = vpop.f32.mrf.mxu0
    %1784 = vdwg.mxu0
    %1785 = vmatpush.bf16.msra.mxu0 %v1278
    %1786 = vmatpush.bf16.msra.mxu0 %v1270
    %1787 = vmatpush.bf16.msra.mxu0 %v1262
    %1788 = vmatpush.bf16.msra.mxu0 %v1254
    %1789 = vmatpush.bf16.msra.mxu0 %v1246
    %1790 = vmatpush.bf16.msra.mxu0 %v1238
    %1791 = vmatpush.bf16.msra.mxu0 %v1230
    %1792 = vmatpush.bf16.msra.mxu0 %v1222
    %1793 = vmatmul.bf16.gmra.mxu0 %v104
    %v1794 = vpop.f32.mrf.mxu0
    %v1795 = vadd.f32 %v1782, %v1794
    %v1796 = vpop.f32.mrf.mxu0
    %1797 = vdwg.mxu0
    %1798 = vmatpush.bf16.msra.mxu0 %v1342
    %1799 = vmatpush.bf16.msra.mxu0 %v1334
    %1800 = vmatpush.bf16.msra.mxu0 %v1326
    %1801 = vmatpush.bf16.msra.mxu0 %v1318
    %1802 = vmatpush.bf16.msra.mxu0 %v1310
    %1803 = vmatpush.bf16.msra.mxu0 %v1302
    %1804 = vmatpush.bf16.msra.mxu0 %v1294
    %1805 = vmatpush.bf16.msra.mxu0 %v1286
    %1806 = vmatmul.bf16.gmra.mxu0 %v110
    %v1807 = vpop.f32.mrf.mxu0
    %v1808 = vadd.f32 %v1795, %v1807
    %v1809 = vpop.f32.mrf.mxu0
    %1810 = vdwg.mxu0
    %1811 = vmatpush.bf16.msra.mxu0 %v1406
    %1812 = vmatpush.bf16.msra.mxu0 %v1398
    %1813 = vmatpush.bf16.msra.mxu0 %v1390
    %1814 = vmatpush.bf16.msra.mxu0 %v1382
    %1815 = vmatpush.bf16.msra.mxu0 %v1374
    %1816 = vmatpush.bf16.msra.mxu0 %v1366
    %1817 = vmatpush.bf16.msra.mxu0 %v1358
    %1818 = vmatpush.bf16.msra.mxu0 %v1350
    %1819 = vmatmul.bf16.gmra.mxu0 %v111
    %v1820 = vpop.f32.mrf.mxu0
    %v1821 = vadd.f32 %v1808, %v1820
    %v1822 = vpop.f32.mrf.mxu0
    %1823 = vdwg.mxu0
    %1824 = vmatpush.bf16.msra.mxu0 %v1215
    %1825 = vmatpush.bf16.msra.mxu0 %v1207
    %1826 = vmatpush.bf16.msra.mxu0 %v1199
    %1827 = vmatpush.bf16.msra.mxu0 %v1191
    %1828 = vmatpush.bf16.msra.mxu0 %v1183
    %1829 = vmatpush.bf16.msra.mxu0 %v1175
    %1830 = vmatpush.bf16.msra.mxu0 %v1167
    %1831 = vmatpush.bf16.msra.mxu0 %v1159
    %1832 = vmatmul.bf16.gmra.mxu0 %v103
    %v1833 = vpop.f32.mrf.mxu0
    %v1834 = vadd.f32 %v375, %v1833
    %v1835 = vpop.f32.mrf.mxu0
    %1836 = vdwg.mxu0
    %1837 = vmatpush.bf16.msra.mxu0 %v1279
    %1838 = vmatpush.bf16.msra.mxu0 %v1271
    %1839 = vmatpush.bf16.msra.mxu0 %v1263
    %1840 = vmatpush.bf16.msra.mxu0 %v1255
    %1841 = vmatpush.bf16.msra.mxu0 %v1247
    %1842 = vmatpush.bf16.msra.mxu0 %v1239
    %1843 = vmatpush.bf16.msra.mxu0 %v1231
    %1844 = vmatpush.bf16.msra.mxu0 %v1223
    %1845 = vmatmul.bf16.gmra.mxu0 %v104
    %v1846 = vpop.f32.mrf.mxu0
    %v1847 = vadd.f32 %v1834, %v1846
    %v1848 = vpop.f32.mrf.mxu0
    %1849 = vdwg.mxu0
    %1850 = vmatpush.bf16.msra.mxu0 %v1343
    %1851 = vmatpush.bf16.msra.mxu0 %v1335
    %1852 = vmatpush.bf16.msra.mxu0 %v1327
    %1853 = vmatpush.bf16.msra.mxu0 %v1319
    %1854 = vmatpush.bf16.msra.mxu0 %v1311
    %1855 = vmatpush.bf16.msra.mxu0 %v1303
    %1856 = vmatpush.bf16.msra.mxu0 %v1295
    %1857 = vmatpush.bf16.msra.mxu0 %v1287
    %1858 = vmatmul.bf16.gmra.mxu0 %v110
    %v1859 = vpop.f32.mrf.mxu0
    %v1860 = vadd.f32 %v1847, %v1859
    %v1861 = vpop.f32.mrf.mxu0
    %1862 = vdwg.mxu0
    %1863 = vmatpush.bf16.msra.mxu0 %v1407
    %1864 = vmatpush.bf16.msra.mxu0 %v1399
    %1865 = vmatpush.bf16.msra.mxu0 %v1391
    %1866 = vmatpush.bf16.msra.mxu0 %v1383
    %1867 = vmatpush.bf16.msra.mxu0 %v1375
    %1868 = vmatpush.bf16.msra.mxu0 %v1367
    %1869 = vmatpush.bf16.msra.mxu0 %v1359
    %1870 = vmatpush.bf16.msra.mxu0 %v1351
    %1871 = vmatmul.bf16.gmra.mxu0 %v111
    %v1872 = vpop.f32.mrf.mxu0
    %v1873 = vadd.f32 %v1860, %v1872
    %v1874 = vpop.f32.mrf.mxu0
    %1875 = vdwg.mxu0
    %1876 = vmatpush.bf16.msra.mxu0 %v1216
    %1877 = vmatpush.bf16.msra.mxu0 %v1208
    %1878 = vmatpush.bf16.msra.mxu0 %v1200
    %1879 = vmatpush.bf16.msra.mxu0 %v1192
    %1880 = vmatpush.bf16.msra.mxu0 %v1184
    %1881 = vmatpush.bf16.msra.mxu0 %v1176
    %1882 = vmatpush.bf16.msra.mxu0 %v1168
    %1883 = vmatpush.bf16.msra.mxu0 %v1160
    %1884 = vmatmul.bf16.gmra.mxu0 %v103
    %v1885 = vpop.f32.mrf.mxu0
    %v1886 = vadd.f32 %v376, %v1885
    %v1887 = vpop.f32.mrf.mxu0
    %1888 = vdwg.mxu0
    %1889 = vmatpush.bf16.msra.mxu0 %v1280
    %1890 = vmatpush.bf16.msra.mxu0 %v1272
    %1891 = vmatpush.bf16.msra.mxu0 %v1264
    %1892 = vmatpush.bf16.msra.mxu0 %v1256
    %1893 = vmatpush.bf16.msra.mxu0 %v1248
    %1894 = vmatpush.bf16.msra.mxu0 %v1240
    %1895 = vmatpush.bf16.msra.mxu0 %v1232
    %1896 = vmatpush.bf16.msra.mxu0 %v1224
    %1897 = vmatmul.bf16.gmra.mxu0 %v104
    %v1898 = vpop.f32.mrf.mxu0
    %v1899 = vadd.f32 %v1886, %v1898
    %v1900 = vpop.f32.mrf.mxu0
    %1901 = vdwg.mxu0
    %1902 = vmatpush.bf16.msra.mxu0 %v1344
    %1903 = vmatpush.bf16.msra.mxu0 %v1336
    %1904 = vmatpush.bf16.msra.mxu0 %v1328
    %1905 = vmatpush.bf16.msra.mxu0 %v1320
    %1906 = vmatpush.bf16.msra.mxu0 %v1312
    %1907 = vmatpush.bf16.msra.mxu0 %v1304
    %1908 = vmatpush.bf16.msra.mxu0 %v1296
    %1909 = vmatpush.bf16.msra.mxu0 %v1288
    %1910 = vmatmul.bf16.gmra.mxu0 %v110
    %v1911 = vpop.f32.mrf.mxu0
    %v1912 = vadd.f32 %v1899, %v1911
    %v1913 = vpop.f32.mrf.mxu0
    %1914 = vdwg.mxu0
    %1915 = vmatpush.bf16.msra.mxu0 %v1408
    %1916 = vmatpush.bf16.msra.mxu0 %v1400
    %1917 = vmatpush.bf16.msra.mxu0 %v1392
    %1918 = vmatpush.bf16.msra.mxu0 %v1384
    %1919 = vmatpush.bf16.msra.mxu0 %v1376
    %1920 = vmatpush.bf16.msra.mxu0 %v1368
    %1921 = vmatpush.bf16.msra.mxu0 %v1360
    %1922 = vmatpush.bf16.msra.mxu0 %v1352
    %1923 = vmatmul.bf16.gmra.mxu0 %v111
    %v1924 = vpop.f32.mrf.mxu0
    %v1925 = vadd.f32 %v1912, %v1924
    %v1926 = vpop.f32.mrf.mxu0
    %1927 = vdwg.mxu0
    %1928 = vmatpush.bf16.msra.mxu0 %v1217
    %1929 = vmatpush.bf16.msra.mxu0 %v1209
    %1930 = vmatpush.bf16.msra.mxu0 %v1201
    %1931 = vmatpush.bf16.msra.mxu0 %v1193
    %1932 = vmatpush.bf16.msra.mxu0 %v1185
    %1933 = vmatpush.bf16.msra.mxu0 %v1177
    %1934 = vmatpush.bf16.msra.mxu0 %v1169
    %1935 = vmatpush.bf16.msra.mxu0 %v1161
    %1936 = vmatmul.bf16.gmra.mxu0 %v103
    %v1937 = vpop.f32.mrf.mxu0
    %v1938 = vadd.f32 %v377, %v1937
    %v1939 = vpop.f32.mrf.mxu0
    %1940 = vdwg.mxu0
    %1941 = vmatpush.bf16.msra.mxu0 %v1281
    %1942 = vmatpush.bf16.msra.mxu0 %v1273
    %1943 = vmatpush.bf16.msra.mxu0 %v1265
    %1944 = vmatpush.bf16.msra.mxu0 %v1257
    %1945 = vmatpush.bf16.msra.mxu0 %v1249
    %1946 = vmatpush.bf16.msra.mxu0 %v1241
    %1947 = vmatpush.bf16.msra.mxu0 %v1233
    %1948 = vmatpush.bf16.msra.mxu0 %v1225
    %1949 = vmatmul.bf16.gmra.mxu0 %v104
    %v1950 = vpop.f32.mrf.mxu0
    %v1951 = vadd.f32 %v1938, %v1950
    %v1952 = vpop.f32.mrf.mxu0
    %1953 = vdwg.mxu0
    %1954 = vmatpush.bf16.msra.mxu0 %v1345
    %1955 = vmatpush.bf16.msra.mxu0 %v1337
    %1956 = vmatpush.bf16.msra.mxu0 %v1329
    %1957 = vmatpush.bf16.msra.mxu0 %v1321
    %1958 = vmatpush.bf16.msra.mxu0 %v1313
    %1959 = vmatpush.bf16.msra.mxu0 %v1305
    %1960 = vmatpush.bf16.msra.mxu0 %v1297
    %1961 = vmatpush.bf16.msra.mxu0 %v1289
    %1962 = vmatmul.bf16.gmra.mxu0 %v110
    %v1963 = vpop.f32.mrf.mxu0
    %v1964 = vadd.f32 %v1951, %v1963
    %v1965 = vpop.f32.mrf.mxu0
    %1966 = vdwg.mxu0
    %1967 = vmatpush.bf16.msra.mxu0 %v1409
    %1968 = vmatpush.bf16.msra.mxu0 %v1401
    %1969 = vmatpush.bf16.msra.mxu0 %v1393
    %1970 = vmatpush.bf16.msra.mxu0 %v1385
    %1971 = vmatpush.bf16.msra.mxu0 %v1377
    %1972 = vmatpush.bf16.msra.mxu0 %v1369
    %1973 = vmatpush.bf16.msra.mxu0 %v1361
    %1974 = vmatpush.bf16.msra.mxu0 %v1353
    %1975 = vmatmul.bf16.gmra.mxu0 %v111
    %v1976 = vpop.f32.mrf.mxu0
    %v1977 = vadd.f32 %v1964, %v1976
    %v1978 = vpop.f32.mrf.mxu0
    %1979 = vdwg.mxu0
    %1980 = vmatpush.bf16.msra.mxu0 %v1218
    %1981 = vmatpush.bf16.msra.mxu0 %v1210
    %1982 = vmatpush.bf16.msra.mxu0 %v1202
    %1983 = vmatpush.bf16.msra.mxu0 %v1194
    %1984 = vmatpush.bf16.msra.mxu0 %v1186
    %1985 = vmatpush.bf16.msra.mxu0 %v1178
    %1986 = vmatpush.bf16.msra.mxu0 %v1170
    %1987 = vmatpush.bf16.msra.mxu0 %v1162
    %1988 = vmatmul.bf16.gmra.mxu0 %v103
    %v1989 = vpop.f32.mrf.mxu0
    %v1990 = vadd.f32 %v378, %v1989
    %v1991 = vpop.f32.mrf.mxu0
    %1992 = vdwg.mxu0
    %1993 = vmatpush.bf16.msra.mxu0 %v1282
    %1994 = vmatpush.bf16.msra.mxu0 %v1274
    %1995 = vmatpush.bf16.msra.mxu0 %v1266
    %1996 = vmatpush.bf16.msra.mxu0 %v1258
    %1997 = vmatpush.bf16.msra.mxu0 %v1250
    %1998 = vmatpush.bf16.msra.mxu0 %v1242
    %1999 = vmatpush.bf16.msra.mxu0 %v1234
    %2000 = vmatpush.bf16.msra.mxu0 %v1226
    %2001 = vmatmul.bf16.gmra.mxu0 %v104
    %v2002 = vpop.f32.mrf.mxu0
    %v2003 = vadd.f32 %v1990, %v2002
    %v2004 = vpop.f32.mrf.mxu0
    %2005 = vdwg.mxu0
    %2006 = vmatpush.bf16.msra.mxu0 %v1346
    %2007 = vmatpush.bf16.msra.mxu0 %v1338
    %2008 = vmatpush.bf16.msra.mxu0 %v1330
    %2009 = vmatpush.bf16.msra.mxu0 %v1322
    %2010 = vmatpush.bf16.msra.mxu0 %v1314
    %2011 = vmatpush.bf16.msra.mxu0 %v1306
    %2012 = vmatpush.bf16.msra.mxu0 %v1298
    %2013 = vmatpush.bf16.msra.mxu0 %v1290
    %2014 = vmatmul.bf16.gmra.mxu0 %v110
    %v2015 = vpop.f32.mrf.mxu0
    %v2016 = vadd.f32 %v2003, %v2015
    %v2017 = vpop.f32.mrf.mxu0
    %2018 = vdwg.mxu0
    %2019 = vmatpush.bf16.msra.mxu0 %v1410
    %2020 = vmatpush.bf16.msra.mxu0 %v1402
    %2021 = vmatpush.bf16.msra.mxu0 %v1394
    %2022 = vmatpush.bf16.msra.mxu0 %v1386
    %2023 = vmatpush.bf16.msra.mxu0 %v1378
    %2024 = vmatpush.bf16.msra.mxu0 %v1370
    %2025 = vmatpush.bf16.msra.mxu0 %v1362
    %2026 = vmatpush.bf16.msra.mxu0 %v1354
    %2027 = vmatmul.bf16.gmra.mxu0 %v111
    %v2028 = vpop.f32.mrf.mxu0
    %v2029 = vadd.f32 %v2016, %v2028
    %v2030 = vpop.f32.mrf.mxu0
    %2031 = vdwg.mxu0
    %2032 = vmatpush.bf16.msra.mxu0 %v1219
    %2033 = vmatpush.bf16.msra.mxu0 %v1211
    %2034 = vmatpush.bf16.msra.mxu0 %v1203
    %2035 = vmatpush.bf16.msra.mxu0 %v1195
    %2036 = vmatpush.bf16.msra.mxu0 %v1187
    %2037 = vmatpush.bf16.msra.mxu0 %v1179
    %2038 = vmatpush.bf16.msra.mxu0 %v1171
    %2039 = vmatpush.bf16.msra.mxu0 %v1163
    %2040 = vmatmul.bf16.gmra.mxu0 %v103
    %v2041 = vpop.f32.mrf.mxu0
    %v2042 = vadd.f32 %v379, %v2041
    %v2043 = vpop.f32.mrf.mxu0
    %2044 = vdwg.mxu0
    %2045 = vmatpush.bf16.msra.mxu0 %v1283
    %2046 = vmatpush.bf16.msra.mxu0 %v1275
    %2047 = vmatpush.bf16.msra.mxu0 %v1267
    %2048 = vmatpush.bf16.msra.mxu0 %v1259
    %2049 = vmatpush.bf16.msra.mxu0 %v1251
    %2050 = vmatpush.bf16.msra.mxu0 %v1243
    %2051 = vmatpush.bf16.msra.mxu0 %v1235
    %2052 = vmatpush.bf16.msra.mxu0 %v1227
    %2053 = vmatmul.bf16.gmra.mxu0 %v104
    %v2054 = vpop.f32.mrf.mxu0
    %v2055 = vadd.f32 %v2042, %v2054
    %v2056 = vpop.f32.mrf.mxu0
    %2057 = vdwg.mxu0
    %2058 = vmatpush.bf16.msra.mxu0 %v1347
    %2059 = vmatpush.bf16.msra.mxu0 %v1339
    %2060 = vmatpush.bf16.msra.mxu0 %v1331
    %2061 = vmatpush.bf16.msra.mxu0 %v1323
    %2062 = vmatpush.bf16.msra.mxu0 %v1315
    %2063 = vmatpush.bf16.msra.mxu0 %v1307
    %2064 = vmatpush.bf16.msra.mxu0 %v1299
    %2065 = vmatpush.bf16.msra.mxu0 %v1291
    %2066 = vmatmul.bf16.gmra.mxu0 %v110
    %v2067 = vpop.f32.mrf.mxu0
    %v2068 = vadd.f32 %v2055, %v2067
    %v2069 = vpop.f32.mrf.mxu0
    %2070 = vdwg.mxu0
    %2071 = vmatpush.bf16.msra.mxu0 %v1411
    %2072 = vmatpush.bf16.msra.mxu0 %v1403
    %2073 = vmatpush.bf16.msra.mxu0 %v1395
    %2074 = vmatpush.bf16.msra.mxu0 %v1387
    %2075 = vmatpush.bf16.msra.mxu0 %v1379
    %2076 = vmatpush.bf16.msra.mxu0 %v1371
    %2077 = vmatpush.bf16.msra.mxu0 %v1363
    %2078 = vmatpush.bf16.msra.mxu0 %v1355
    %2079 = vmatmul.bf16.gmra.mxu0 %v111
    %v2080 = vpop.f32.mrf.mxu0
    %v2081 = vadd.f32 %v2068, %v2080
    %v2082 = vpop.f32.mrf.mxu0
    %2083 = vdwg.mxu0
    %v2084 = vxor.u32 %v1717, 2147483648
    %v2085 = vxor.u32 %v1769, 2147483648
    %v2086 = vmul.f32 %v2084, 1.442695
    %v2087 = vpow.pop %v2086
    %v2088 = vmul.f32 %v2085, 1.442695
    %v2089 = vpow.pop %v2088
    %v2090 = vadd.f32 %v2087, 1.0
    %v2091 = vadd.f32 %v2089, 1.0
    %v2092 = vrcp.pop %v2090
    %v2093 = vmul.f32 %v2090, %v2092
    %v2094 = vsub.f32 1.0, %v2093
    %v2095 = vmul.f32 %v2092, %v2094
    %v2096 = vadd.f32 %v2092, %v2095
    %vm2097 = vweird.f32 %v2090
    %vm2098 = vweird.f32 %v2092
    %vm2099 = vmor %vm2097, %vm2098
    %v2100 = vsel %vm2099, %v2092, %v2096
    %v2101 = vand.u32 2147483647, %v2090
    %vm2102 = vcmp.eq.f32.partialorder %v2101, 8.507059e+37
    %v2103 = vand.u32 %v2090, 2147483648
    %v2104 = vor.u32 1.1754944e-38, %v2103
    %v2105 = vsel %vm2102, %v2104, %v2100
    %v2106 = vmul.f32 1.0, %v2105
    %v2107 = vrcp.pop %v2091
    %v2108 = vmul.f32 %v2091, %v2107
    %v2109 = vsub.f32 1.0, %v2108
    %v2110 = vmul.f32 %v2107, %v2109
    %v2111 = vadd.f32 %v2107, %v2110
    %vm2112 = vweird.f32 %v2091
    %vm2113 = vweird.f32 %v2107
    %vm2114 = vmor %vm2112, %vm2113
    %v2115 = vsel %vm2114, %v2107, %v2111
    %v2116 = vand.u32 2147483647, %v2091
    %vm2117 = vcmp.eq.f32.partialorder %v2116, 8.507059e+37
    %v2118 = vand.u32 %v2091, 2147483648
    %v2119 = vor.u32 1.1754944e-38, %v2118
    %v2120 = vsel %vm2117, %v2119, %v2115
    %v2121 = vmul.f32 1.0, %v2120
    %v2122 = vxor.u32 %v1821, 2147483648
    %v2123 = vxor.u32 %v1873, 2147483648
    %v2124 = vmul.f32 %v2122, 1.442695
    %v2125 = vpow.pop %v2124
    %v2126 = vmul.f32 %v2123, 1.442695
    %v2127 = vpow.pop %v2126
    %v2128 = vadd.f32 %v2125, 1.0
    %v2129 = vadd.f32 %v2127, 1.0
    %v2130 = vrcp.pop %v2128
    %v2131 = vmul.f32 %v2128, %v2130
    %v2132 = vsub.f32 1.0, %v2131
    %v2133 = vmul.f32 %v2130, %v2132
    %v2134 = vadd.f32 %v2130, %v2133
    %vm2135 = vweird.f32 %v2128
    %vm2136 = vweird.f32 %v2130
    %vm2137 = vmor %vm2135, %vm2136
    %v2138 = vsel %vm2137, %v2130, %v2134
    %v2139 = vand.u32 2147483647, %v2128
    %vm2140 = vcmp.eq.f32.partialorder %v2139, 8.507059e+37
    %v2141 = vand.u32 %v2128, 2147483648
    %v2142 = vor.u32 1.1754944e-38, %v2141
    %v2143 = vsel %vm2140, %v2142, %v2138
    %v2144 = vmul.f32 1.0, %v2143
    %v2145 = vrcp.pop %v2129
    %v2146 = vmul.f32 %v2129, %v2145
    %v2147 = vsub.f32 1.0, %v2146
    %v2148 = vmul.f32 %v2145, %v2147
    %v2149 = vadd.f32 %v2145, %v2148
    %vm2150 = vweird.f32 %v2129
    %vm2151 = vweird.f32 %v2145
    %vm2152 = vmor %vm2150, %vm2151
    %v2153 = vsel %vm2152, %v2145, %v2149
    %v2154 = vand.u32 2147483647, %v2129
    %vm2155 = vcmp.eq.f32.partialorder %v2154, 8.507059e+37
    %v2156 = vand.u32 %v2129, 2147483648
    %v2157 = vor.u32 1.1754944e-38, %v2156
    %v2158 = vsel %vm2155, %v2157, %v2153
    %v2159 = vmul.f32 1.0, %v2158
    %v2160 = vtanh.pop %v1925
    %v2161 = vtanh.pop %v1977
    %v2162 = vxor.u32 %v2029, 2147483648
    %v2163 = vxor.u32 %v2081, 2147483648
    %v2164 = vmul.f32 %v2162, 1.442695
    %v2165 = vpow.pop %v2164
    %v2166 = vmul.f32 %v2163, 1.442695
    %v2167 = vpow.pop %v2166
    %v2168 = vadd.f32 %v2165, 1.0
    %v2169 = vadd.f32 %v2167, 1.0
    %v2170 = vrcp.pop %v2168
    %v2171 = vmul.f32 %v2168, %v2170
    %v2172 = vsub.f32 1.0, %v2171
    %v2173 = vmul.f32 %v2170, %v2172
    %v2174 = vadd.f32 %v2170, %v2173
    %vm2175 = vweird.f32 %v2168
    %vm2176 = vweird.f32 %v2170
    %vm2177 = vmor %vm2175, %vm2176
    %v2178 = vsel %vm2177, %v2170, %v2174
    %v2179 = vand.u32 2147483647, %v2168
    %vm2180 = vcmp.eq.f32.partialorder %v2179, 8.507059e+37
    %v2181 = vand.u32 %v2168, 2147483648
    %v2182 = vor.u32 1.1754944e-38, %v2181
    %v2183 = vsel %vm2180, %v2182, %v2178
    %v2184 = vmul.f32 1.0, %v2183
    %v2185 = vrcp.pop %v2169
    %v2186 = vmul.f32 %v2169, %v2185
    %v2187 = vsub.f32 1.0, %v2186
    %v2188 = vmul.f32 %v2185, %v2187
    %v2189 = vadd.f32 %v2185, %v2188
    %vm2190 = vweird.f32 %v2169
    %vm2191 = vweird.f32 %v2185
    %vm2192 = vmor %vm2190, %vm2191
    %v2193 = vsel %vm2192, %v2185, %v2189
    %v2194 = vand.u32 2147483647, %v2169
    %vm2195 = vcmp.eq.f32.partialorder %v2194, 8.507059e+37
    %v2196 = vand.u32 %v2169, 2147483648
    %v2197 = vor.u32 1.1754944e-38, %v2196
    %v2198 = vsel %vm2195, %v2197, %v2193
    %v2199 = vmul.f32 1.0, %v2198
    %v2200 = vld [vmem:[#allocation7] sm:$0xff]
    %v2201 = vld [vmem:[#allocation7 + $0x8] sm:$0xff]
    %v2202 = vmul.f32 %v2144, %v2200
    %v2203 = vmul.f32 %v2159, %v2201
    %v2204 = vmul.f32 %v2106, %v2160
    %v2205 = vmul.f32 %v2121, %v2161
    %v2206 = vadd.f32 %v2202, %v2204
    %v2207 = vadd.f32 %v2203, %v2205
    %v2208 = vtanh.pop %v2206
    %v2209 = vtanh.pop %v2207
    %v2210 = vmul.f32 %v2184, %v2208
    %v2211 = vmul.f32 %v2199, %v2209
    %2212 = vst [vmem:[#allocation12] sm:$0xff] %v2206
    %2213 = vst [vmem:[#allocation12 + $0x8] sm:$0xff] %v2207
    %2214 = vst [vmem:[#allocation11] sm:$0xff] %v2210
    %2215 = vst [vmem:[#allocation11 + $0x8] sm:$0xff] %v2211
    // Predicated region
    $region42: #{lstm_cell_forward.1} parent=1 // pred_check
      _
    $region43: #{lstm_cell_forward.1} parent=1 // pred_check_branch
      %2217 = sbr.rel (0) target = $region45
    $region44: #{lstm_cell_forward.1} parent=1 // pred_region
      %2219 = vsyncadd [#allocation4], 0
      %s2221 = sshll.u32 [#allocation11], 4
      %s2222 = int_to_ptr.vmem [resolvable:$true] %s2221
      %s2223 = sshll.u32 %s5, 4
      %s2224 = int_to_ptr.hbm [resolvable:$true] %s2223
      %2226 = dma.vmem_to_hbm [thread:$0]  %s2222, 256, %s2224, [#allocation4]
    $region45: #{lstm_cell_forward.1} parent=1 // pred_fallthru
      _
    // Predicated region
    $region46: #{lstm_cell_forward.1} parent=1 // pred_check
      _
    $region47: #{lstm_cell_forward.1} parent=1 // pred_check_branch
      %2228 = sbr.rel (0) target = $region49
    $region48: #{lstm_cell_forward.1} parent=1 // pred_region
      %2230 = vsyncadd [#allocation13], 0
      %s2232 = sshll.u32 [#allocation12], 4
      %s2233 = int_to_ptr.vmem [resolvable:$true] %s2232
      %s2234 = sshll.u32 %s6, 4
      %s2235 = int_to_ptr.hbm [resolvable:$true] %s2234
      %2237 = dma.vmem_to_hbm [thread:$0]  %s2233, 256, %s2235, [#allocation13]
    $region49: #{lstm_cell_forward.1} parent=1 // pred_fallthru
      _
    // Predicated region
    $region50: #{lstm_cell_forward.1} parent=1 // pred_check
      _
    $region51: #{lstm_cell_forward.1} parent=1 // pred_check_branch
      %2239 = sbr.rel (0) target = $region53
    $region52: #{lstm_cell_forward.1} parent=1 // pred_region
      %2241 = dma.done [#allocation4], 256
    $region53: #{lstm_cell_forward.1} parent=1 // pred_fallthru
      _
    // Predicated region
    $region54: #{lstm_cell_forward.1} parent=1 // pred_check
      _
    $region55: #{lstm_cell_forward.1} parent=1 // pred_check_branch
      %2243 = sbr.rel (0) target = $region57
    $region56: #{lstm_cell_forward.1} parent=1 // pred_region
      %2245 = dma.done [#allocation13], 256
    $region57: #{lstm_cell_forward.1} parent=1 // pred_fallthru
      _
    %2246 = vsyncpa [#allocation3], 1
    %2247 = vsyncpa [#allocation6], 1
    %2248 = vsyncpa [#allocation9], 1
    %2249 = vsyncpa [#allocation4], 1
    %2250 = vsyncpa [#allocation13], 1

</llo_original>
